<compile_context>
chip_gen: v6e
topology: v6e:2x2x1
jax: 0.10.0
libtpu: 0.0.40
codegen_flags: <defaults>
</compile_context>

<pallas_src>
import numpy as np
import jax
import jax.numpy as jnp
from jax import lax
from jax.experimental import pallas as pl
from jax.experimental.pallas import tpu as pltpu

BN_EPS = 1e-5
INV_SQRT2 = 0.7071067811865476


def _round_up(a, b):
    return (a + b - 1) // b * b


def _full_spec(shape):
    zeros = (0,) * len(shape)
    return pl.BlockSpec(shape, lambda n, s: zeros)


def _vmem_limit_bytes(frac=0.75, cap=96 * 1024 * 1024):
    """Per-generation VMEM budget: ~75% of physical, capped at 96 MiB."""
    vmem_cap = 128 * 1024 * 1024
    try:
        info = pltpu.get_tpu_info()
        vmem_cap = int(getattr(info, "vmem_capacity_bytes", vmem_cap))
    except Exception:
        pass
    return int(min(cap, max(16 * 1024 * 1024, vmem_cap * frac)))


def _choose_echunk(E, max_chunk=1536):
    """Static chunk width for the expansion dim (must divide E)."""
    if E <= max_chunk:
        return E
    for ec in (1536, 1024, 768, 512, 384, 256, 128):
        if ec <= max_chunk and E % ec == 0:
            return ec
    return E


def _choose_tile(S, ts_max, fits):
    """Spatial tile: prefer zero padding, then the largest tile that fits."""
    cand = []
    if S <= ts_max:
        cand.append(S)                      # whole-S tile: no pad, no slice
    t = 128
    while t <= ts_max:
        cand.append(t)
        t += 128
    cand = [t for t in cand if fits(t)]
    if not cand:
        cand = [S if S < 128 else 128]
    ts = min(cand, key=lambda t: ((-S) % t, -t))
    return ts, _round_up(S, ts)


# --------------------------------------------------------------------------- #
# Phase 1: per-channel batch statistics of y = Wpw @ x (sum, sum of squares). #
# Per-batch partial sums -> megacore-shardable over N on v7x.                 #
# --------------------------------------------------------------------------- #
def stats_kernel(x_ref, wpw_ref, stats_ref):
    @pl.when(pl.program_id(1) == 0)
    def _init():
        stats_ref[...] = jnp.zeros_like(stats_ref)

    x = x_ref[0]                                                    # (C, TS) f32
    y = jnp.dot(wpw_ref[...], x.astype(jnp.bfloat16),
                preferred_element_type=jnp.float32)                 # (C, TS) f32
    upd = jnp.concatenate(
        [jnp.sum(y, axis=1, keepdims=True),
         jnp.sum(y * y, axis=1, keepdims=True)], axis=1)            # (C, 2)
    stats_ref[0] = stats_ref[0] + upd
    # Zero-padded pixel columns contribute exactly 0 (pwconv is bias-free),
    # so dividing by the true pixel count in the wrapper gives exact stats.


# --------------------------------------------------------------------------- #
# Phase 2: h = W1'@x (pwconv+BN folded), GELU, z = W2g@h + b2g, residual.     #
# --------------------------------------------------------------------------- #
def make_main_kernel(ec, n_chunks):
    def main_kernel(x_ref, w1_ref, b1_ref, w2_ref, b2_ref, o_ref):
        x = x_ref[0]                                                # (C, TS) f32
        xb = x.astype(jnp.bfloat16)
        z = None
        for ci in range(n_chunks):
            if n_chunks == 1:
                w1c, b1c, w2c = w1_ref[...], b1_ref[...], w2_ref[...]
            else:
                lo = ci * ec
                w1c = w1_ref[lo:lo + ec, :]
                b1c = b1_ref[lo:lo + ec, :]
                w2c = w2_ref[:, lo:lo + ec]
            h = jnp.dot(w1c, xb, preferred_element_type=jnp.float32) + b1c
            h = 0.5 * h * (1.0 + lax.erf(h * INV_SQRT2))            # exact nn.GELU
            zc = jnp.dot(w2c, h.astype(jnp.bfloat16),
                         preferred_element_type=jnp.float32)        # (C, TS)
            z = zc if z is None else z + zc
        o_ref[0] = x + z + b2_ref[...]                              # residual (drop_path=Id)
    return main_kernel


def dilated_conv_forward(x_nchw, params, *, ts_max=1024):
    """x_nchw: (N, C, H, W) float32. Returns (N, C, H, W) float32."""
    N, C, H, W = x_nchw.shape
    S = H * W
    M = N * S
    E = params["w1"].shape[0]

    vmem_limit = _vmem_limit_bytes()
    EC = _choose_echunk(E)

    def footprint(ts):
        xb_out = 2 * 2 * C * ts * 4                  # x + out tiles, double-buffered f32
        weights = 2 * (E * C + C * E + C * C) * 2    # bf16 weights, double-buffered
        hidden = EC * ts * (4 + 2)                   # f32 hidden chunk + bf16 copy
        acc = C * ts * 4                             # z accumulator
        biases = 2 * (E + 2 * C) * 4
        return xb_out + weights + hidden + acc + biases + (1 << 20)

    TS, S_pad = _choose_tile(S, ts_max, lambda ts: footprint(ts) <= vmem_limit)
    n_s = S_pad // TS
    grid = (N, n_s)

    # NCHW -> (N, C, S): pure reshape, no transpose.  Pad only if a partial
    # last tile is unavoidable (whole-S tiles skip both the pad and the slice).
    x3 = x_nchw.reshape(N, C, S)
    if S_pad != S:
        x3 = jnp.pad(x3, ((0, 0), (0, 0), (0, S_pad - S)))

    x_spec = pl.BlockSpec((1, C, TS), lambda n, s: (n, 0, s))
    wpw_b = params["wpw"].astype(jnp.bfloat16)                       # (C, C)

    # ---- call 1: BN batch statistics (per-batch partials, s-axis reduced) -- #
    stats = pl.pallas_call(
        stats_kernel,
        out_shape=jax.ShapeDtypeStruct((N, C, 2), jnp.float32),
        grid=grid,
        in_specs=[x_spec, _full_spec((C, C))],
        out_specs=pl.BlockSpec((1, C, 2), lambda n, s: (n, 0, 0)),
        compiler_params=pltpu.CompilerParams(
            dimension_semantics=("parallel", "arbitrary"),
            vmem_limit_bytes=vmem_limit),
        cost_estimate=pl.CostEstimate(
            flops=2 * N * S_pad * C * C,
            transcendentals=0,
            bytes_accessed=N * S_pad * C * 4 + C * C * 2 + N * C * 2 * 4),
    )(x3, wpw_b)

    # Tiny fold in plain JAX: BN(y) = y * scale + shift, then fold pwconv + BN
    # into the first MLP matmul (f32, single bf16 cast) and gamma into the last.
    stats_sum = jnp.sum(stats, axis=0)                               # (C, 2)
    mu = stats_sum[:, 0] / M
    var = jnp.maximum(stats_sum[:, 1] / M - mu * mu, 0.0)            # biased var
    inv = lax.rsqrt(var + BN_EPS)
    scale = inv * params["bn_w"]                                     # (C,)
    shift = params["bn_b"] - mu * scale                              # (C,)

    w1p = ((params["w1"] * scale[None, :]) @ params["wpw"]).astype(jnp.bfloat16)  # (E, C)
    b1p = (params["w1"] @ shift + params["b1"]).reshape(E, 1).astype(jnp.float32)
    w2g = (params["w2"] * params["gamma"][:, None]).astype(jnp.bfloat16)          # (C, E)
    b2g = (params["b2"] * params["gamma"]).reshape(C, 1).astype(jnp.float32)

    # ---- call 2: folded MLP + residual (fully parallel over tiles) --------- #
    out3 = pl.pallas_call(
        make_main_kernel(EC, E // EC),
        out_shape=jax.ShapeDtypeStruct((N, C, S_pad), jnp.float32),
        grid=grid,
        in_specs=[x_spec,
                  _full_spec((E, C)), _full_spec((E, 1)),
                  _full_spec((C, E)), _full_spec((C, 1))],
        out_specs=x_spec,
        compiler_params=pltpu.CompilerParams(
            dimension_semantics=("parallel", "parallel"),
            vmem_limit_bytes=vmem_limit),
        cost_estimate=pl.CostEstimate(
            flops=4 * N * S_pad * C * E,
            transcendentals=N * S_pad * E,
            bytes_accessed=2 * N * S_pad * C * 4 + 4 * C * E),
    )(x3, w1p, b1p, w2g, b2g)

    if S_pad != S:
        out3 = out3[:, :, :S]
    return out3.reshape(N, C, H, W)


def reference_forward(x_nchw, params):
    """Pure-JAX (f32) reference matching the PyTorch forward."""
    N, C, H, W = x_nchw.shape
    xf = x_nchw.reshape(N, C, H * W)
    y = jnp.einsum("oc,ncs->nos", params["wpw"], xf)          # pwconv(input), no bias
    mu = jnp.mean(y, axis=(0, 2), keepdims=True)
    var = jnp.mean((y - mu) ** 2, axis=(0, 2), keepdims=True)
    yb = (y - mu) / jnp.sqrt(var + BN_EPS)
    yb = yb * params["bn_w"][None, :, None] + params["bn_b"][None, :, None]
    h = jnp.einsum("ec,ncs->nes", params["w1"], yb) + params["b1"][None, :, None]
    h = 0.5 * h * (1.0 + lax.erf(h * INV_SQRT2))
    z = jnp.einsum("ce,nes->ncs", params["w2"], h) + params["b2"][None, :, None]
    out = xf + params["gamma"][None, :, None] * z
    return out.reshape(N, C, H, W)


def init_params(key, dim, expan_ratio=6, layer_scale_init_value=1e-6):
    E = expan_ratio * dim
    k = jax.random.split(key, 5)

    def uniform(kk, shape, fan_in):
        bound = 1.0 / np.sqrt(fan_in)
        return jax.random.uniform(kk, shape, jnp.float32, -bound, bound)

    # Torch layouts (channels-first matmuls use them directly, no transpose).
    return {
        "wpw": uniform(k[0], (dim, dim), dim),   # Conv2d(dim, dim, 1) weight (out, in)
        "bn_w": jnp.ones((dim,), jnp.float32),
        "bn_b": jnp.zeros((dim,), jnp.float32),
        "w1": uniform(k[1], (E, dim), dim),      # Linear(dim, E).weight
        "b1": uniform(k[3], (E,), dim),
        "w2": uniform(k[2], (dim, E), E),        # Linear(E, dim).weight
        "b2": uniform(k[4], (dim,), E),
        "gamma": layer_scale_init_value * jnp.ones((dim,), jnp.float32),
    }


if __name__ == "__main__":
    key = jax.random.PRNGKey(0)
    kx, kp = jax.random.split(key)

    N, dim, H, W = 2, 32, 16, 16           # S = 256 pixels/image -> one whole-S tile
    x = jax.random.normal(kx, (N, dim, H, W), jnp.float32)
    params = init_params(kp, dim)

    fwd = jax.jit(dilated_conv_forward)
    out = jax.block_until_ready(fwd(x, params))
    ref = jax.block_until_ready(reference_forward(x, params))

    assert out.shape == x.shape and out.dtype == jnp.float32
    np.testing.assert_allclose(np.asarray(out), np.asarray(ref), rtol=1e-4, atol=1e-4)
    print("KERNEL_OK")
</pallas_src>

<mosaic_0001>
module attributes {stable_mosaic.version = 11 : i64} {
  func.func @stats_kernel(%arg0: i32, %arg1: i32, %arg2: memref<1x32x256xf32, #tpu.memory_space<vmem>>, %arg3: memref<32x32xbf16, #tpu.memory_space<vmem>>, %arg4: memref<1x32x2xf32, #tpu.memory_space<vmem>>) attributes {dimension_semantics = [#tpu.dimension_semantics<parallel>, #tpu.dimension_semantics<arbitrary>], iteration_bounds = array<i64: 2, 1>, scalar_prefetch = 0 : i64, scratch_operands = 0 : i64, tpu.core_type = #tpu.core_type<tc>, window_params = [{transform_indices = @transform_0, window_bounds = array<i64: 1, 32, 256>}, {pipeline_mode = #tpu.pipeline_mode<synchronous>, transform_indices = @transform_1, window_bounds = array<i64: 32, 32>}, {transform_indices = @transform_2, window_bounds = array<i64: 1, 32, 2>}]} {
    %c0_i32 = arith.constant 0 : i32
    %0 = arith.cmpi eq, %arg1, %c0_i32 : i32
    %1 = arith.extui %0 : i1 to i32
    %c0_i32_0 = arith.constant 0 : i32
    %2 = arith.cmpi ne, %1, %c0_i32_0 : i32
    scf.if %2 {
      %cst_13 = arith.constant 0.000000e+00 : f32
      %20 = vector.broadcast %cst_13 : f32 to vector<1x32x2xf32>
      %c0_14 = arith.constant 0 : index
      %c0_15 = arith.constant 0 : index
      %c0_16 = arith.constant 0 : index
      %21 = vector.load %arg4[%c0_14, %c0_15, %c0_16] : memref<1x32x2xf32, #tpu.memory_space<vmem>>, vector<1x32x2xf32>
      tpu.vector_store %arg4[%c0_14, %c0_15, %c0_16], %20 {strides = array<i32>} : memref<1x32x2xf32, #tpu.memory_space<vmem>>, vector<1x32x2xf32>,
    } else {
    }
    %c0 = arith.constant 0 : index
    %c0_1 = arith.constant 0 : index
    %c0_2 = arith.constant 0 : index
    %3 = vector.load %arg2[%c0, %c0_1, %c0_2] : memref<1x32x256xf32, #tpu.memory_space<vmem>>, vector<1x32x256xf32>
    %4 = vector.shape_cast %3 : vector<1x32x256xf32> to vector<32x256xf32>
    %c0_3 = arith.constant 0 : index
    %c0_4 = arith.constant 0 : index
    %5 = vector.load %arg3[%c0_3, %c0_4] : memref<32x32xbf16, #tpu.memory_space<vmem>>, vector<32x32xbf16>
    %6 = arith.truncf %4 : vector<32x256xf32> to vector<32x256xbf16>
    %cst = arith.constant dense<0.000000e+00> : vector<32x256xf32>
    %7 = tpu.matmul %5, %6, %cst {dimension_numbers = #tpu.dot_dimension_numbers<[1], [0], [0], [1], [0, 0, 1, 1], [], []>} : vector<32x32xbf16>, vector<32x256xbf16>, vector<32x256xf32> -> vector<32x256xf32>
    %cst_5 = arith.constant dense<0.000000e+00> : vector<32xf32>
    %8 = vector.multi_reduction <add>, %7, %cst_5 [1] : vector<32x256xf32> to vector<32xf32>
    %9 = vector.shape_cast %8 : vector<32xf32> to vector<32x1xf32>
    %10 = arith.mulf %7, %7 : vector<32x256xf32>
    %cst_6 = arith.constant dense<0.000000e+00> : vector<32xf32>
    %11 = vector.multi_reduction <add>, %10, %cst_6 [1] : vector<32x256xf32> to vector<32xf32>
    %12 = vector.shape_cast %11 : vector<32xf32> to vector<32x1xf32>
    %13 = tpu.concatenate %9, %12 in 1 : vector<32x1xf32>, vector<32x1xf32> -> vector<32x2xf32>
    %c0_7 = arith.constant 0 : index
    %c0_8 = arith.constant 0 : index
    %c0_9 = arith.constant 0 : index
    %14 = vector.load %arg4[%c0_7, %c0_8, %c0_9] : memref<1x32x2xf32, #tpu.memory_space<vmem>>, vector<1x32x2xf32>
    %15 = vector.shape_cast %14 : vector<1x32x2xf32> to vector<32x2xf32>
    %16 = arith.addf %15, %13 : vector<32x2xf32>
    %c0_10 = arith.constant 0 : index
    %c0_11 = arith.constant 0 : index
    %c0_12 = arith.constant 0 : index
    %17 = vector.load %arg4[%c0_10, %c0_11, %c0_12] : memref<1x32x2xf32, #tpu.memory_space<vmem>>, vector<1x32x2xf32>
    %18 = vector.shape_cast %17 : vector<1x32x2xf32> to vector<32x2xf32>
    %19 = vector.shape_cast %16 : vector<32x2xf32> to vector<1x32x2xf32>
    tpu.vector_store %arg4[%c0_10, %c0_11, %c0_12], %19 {strides = array<i32>} : memref<1x32x2xf32, #tpu.memory_space<vmem>>, vector<1x32x2xf32>,
    return
  }
  func.func @transform_0(%arg0: i32, %arg1: i32) -> (i32, i32, i32) {
    %c0_i32 = arith.constant 0 : i32
    %c0_i32_0 = arith.constant 0 : i32
    return %arg0, %c0_i32, %arg1 : i32, i32, i32
  }
  func.func @transform_1(%arg0: i32, %arg1: i32) -> (i32, i32) {
    %c0_i32 = arith.constant 0 : i32
    %c0_i32_0 = arith.constant 0 : i32
    %c0_i32_1 = arith.constant 0 : i32
    return %c0_i32, %c0_i32_0 : i32, i32
  }
  func.func @transform_2(%arg0: i32, %arg1: i32) -> (i32, i32, i32) {
    %c0_i32 = arith.constant 0 : i32
    %c0_i32_0 = arith.constant 0 : i32
    %c0_i32_1 = arith.constant 0 : i32
    return %arg0, %c0_i32, %c0_i32_0 : i32, i32, i32
  }
}

module attributes {stable_mosaic.version = 11 : i64} {
  func.func @main_kernel(%arg0: i32, %arg1: i32, %arg2: memref<1x32x256xf32, #tpu.memory_space<vmem>>, %arg3: memref<192x32xbf16, #tpu.memory_space<vmem>>, %arg4: memref<192x1xf32, #tpu.memory_space<vmem>>, %arg5: memref<32x192xbf16, #tpu.memory_space<vmem>>, %arg6: memref<32x1xf32, #tpu.memory_space<vmem>>, %arg7: memref<1x32x256xf32, #tpu.memory_space<vmem>>) attributes {dimension_semantics = [#tpu.dimension_semantics<parallel>, #tpu.dimension_semantics<parallel>], iteration_bounds = array<i64: 2, 1>, scalar_prefetch = 0 : i64, scratch_operands = 0 : i64, tpu.core_type = #tpu.core_type<tc>, window_params = [{transform_indices = @transform_0, window_bounds = array<i64: 1, 32, 256>}, {pipeline_mode = #tpu.pipeline_mode<synchronous>, transform_indices = @transform_1, window_bounds = array<i64: 192, 32>}, {pipeline_mode = #tpu.pipeline_mode<synchronous>, transform_indices = @transform_2, window_bounds = array<i64: 192, 1>}, {pipeline_mode = #tpu.pipeline_mode<synchronous>, transform_indices = @transform_3, window_bounds = array<i64: 32, 192>}, {pipeline_mode = #tpu.pipeline_mode<synchronous>, transform_indices = @transform_4, window_bounds = array<i64: 32, 1>}, {transform_indices = @transform_5, window_bounds = array<i64: 1, 32, 256>}]} {
    %c0 = arith.constant 0 : index
    %c0_0 = arith.constant 0 : index
    %c0_1 = arith.constant 0 : index
    %0 = vector.load %arg2[%c0, %c0_0, %c0_1] : memref<1x32x256xf32, #tpu.memory_space<vmem>>, vector<1x32x256xf32>
    %1 = vector.shape_cast %0 : vector<1x32x256xf32> to vector<32x256xf32>
    %2 = arith.truncf %1 : vector<32x256xf32> to vector<32x256xbf16>
    %c0_2 = arith.constant 0 : index
    %c0_3 = arith.constant 0 : index
    %3 = vector.load %arg3[%c0_2, %c0_3] : memref<192x32xbf16, #tpu.memory_space<vmem>>, vector<192x32xbf16>
    %c0_4 = arith.constant 0 : index
    %c0_5 = arith.constant 0 : index
    %4 = vector.load %arg4[%c0_4, %c0_5] : memref<192x1xf32, #tpu.memory_space<vmem>>, vector<192x1xf32>
    %c0_6 = arith.constant 0 : index
    %c0_7 = arith.constant 0 : index
    %5 = vector.load %arg5[%c0_6, %c0_7] : memref<32x192xbf16, #tpu.memory_space<vmem>>, vector<32x192xbf16>
    %cst = arith.constant dense<0.000000e+00> : vector<192x256xf32>
    %6 = tpu.matmul %3, %2, %cst {dimension_numbers = #tpu.dot_dimension_numbers<[1], [0], [0], [1], [0, 0, 1, 1], [], []>} : vector<192x32xbf16>, vector<32x256xbf16>, vector<192x256xf32> -> vector<192x256xf32>
    %7 = vector.broadcast %4 : vector<192x1xf32> to vector<192x256xf32>
    %8 = arith.addf %6, %7 : vector<192x256xf32>
    %cst_8 = arith.constant 5.000000e-01 : f32
    %9 = vector.broadcast %cst_8 : f32 to vector<192x256xf32>
    %10 = arith.mulf %9, %8 : vector<192x256xf32>
    %cst_9 = arith.constant 0.707106769 : f32
    %11 = vector.broadcast %cst_9 : f32 to vector<192x256xf32>
    %12 = arith.mulf %8, %11 : vector<192x256xf32>
    %13 = math.erf %12 : vector<192x256xf32>
    %cst_10 = arith.constant 1.000000e+00 : f32
    %14 = vector.broadcast %cst_10 : f32 to vector<192x256xf32>
    %15 = arith.addf %14, %13 : vector<192x256xf32>
    %16 = arith.mulf %10, %15 : vector<192x256xf32>
    %17 = arith.truncf %16 : vector<192x256xf32> to vector<192x256xbf16>
    %cst_11 = arith.constant dense<0.000000e+00> : vector<32x256xf32>
    %18 = tpu.matmul %5, %17, %cst_11 {dimension_numbers = #tpu.dot_dimension_numbers<[1], [0], [0], [1], [0, 0, 1, 1], [], []>} : vector<32x192xbf16>, vector<192x256xbf16>, vector<32x256xf32> -> vector<32x256xf32>
    %19 = arith.addf %1, %18 : vector<32x256xf32>
    %c0_12 = arith.constant 0 : index
    %c0_13 = arith.constant 0 : index
    %20 = vector.load %arg6[%c0_12, %c0_13] : memref<32x1xf32, #tpu.memory_space<vmem>>, vector<32x1xf32>
    %21 = vector.broadcast %20 : vector<32x1xf32> to vector<32x256xf32>
    %22 = arith.addf %19, %21 : vector<32x256xf32>
    %c0_14 = arith.constant 0 : index
    %c0_15 = arith.constant 0 : index
    %c0_16 = arith.constant 0 : index
    %23 = vector.load %arg7[%c0_14, %c0_15, %c0_16] : memref<1x32x256xf32, #tpu.memory_space<vmem>>, vector<1x32x256xf32>
    %24 = vector.shape_cast %23 : vector<1x32x256xf32> to vector<32x256xf32>
    %25 = vector.shape_cast %22 : vector<32x256xf32> to vector<1x32x256xf32>
    tpu.vector_store %arg7[%c0_14, %c0_15, %c0_16], %25 {strides = array<i32>} : memref<1x32x256xf32, #tpu.memory_space<vmem>>, vector<1x32x256xf32>,
    return
  }
  func.func @transform_0(%arg0: i32, %arg1: i32) -> (i32, i32, i32) {
    %c0_i32 = arith.constant 0 : i32
    %c0_i32_0 = arith.constant 0 : i32
    return %arg0, %c0_i32, %arg1 : i32, i32, i32
  }
  func.func @transform_1(%arg0: i32, %arg1: i32) -> (i32, i32) {
    %c0_i32 = arith.constant 0 : i32
    %c0_i32_0 = arith.constant 0 : i32
    %c0_i32_1 = arith.constant 0 : i32
    return %c0_i32, %c0_i32_0 : i32, i32
  }
  func.func @transform_2(%arg0: i32, %arg1: i32) -> (i32, i32) {
    %c0_i32 = arith.constant 0 : i32
    %c0_i32_0 = arith.constant 0 : i32
    %c0_i32_1 = arith.constant 0 : i32
    return %c0_i32, %c0_i32_0 : i32, i32
  }
  func.func @transform_3(%arg0: i32, %arg1: i32) -> (i32, i32) {
    %c0_i32 = arith.constant 0 : i32
    %c0_i32_0 = arith.constant 0 : i32
    %c0_i32_1 = arith.constant 0 : i32
    return %c0_i32, %c0_i32_0 : i32, i32
  }
  func.func @transform_4(%arg0: i32, %arg1: i32) -> (i32, i32) {
    %c0_i32 = arith.constant 0 : i32
    %c0_i32_0 = arith.constant 0 : i32
    %c0_i32_1 = arith.constant 0 : i32
    return %c0_i32, %c0_i32_0 : i32, i32
  }
  func.func @transform_5(%arg0: i32, %arg1: i32) -> (i32, i32, i32) {
    %c0_i32 = arith.constant 0 : i32
    %c0_i32_0 = arith.constant 0 : i32
    return %arg0, %c0_i32, %arg1 : i32, i32, i32
  }
}

</mosaic_0001>

<llo_original>
// kernel: dilated_conv_forward.2
$region0: #{dilated_conv_forward.2}
  #allocation0 [shape = 'u32[]', space=smem, size = 0x4, offset = 0x4, fixed_abs, tag = 'smem constant byte address 0x4 - core index']
  #allocation1 [shape = 'u32[144,128]{1,0:T(1,128)}', space=vmem, size = 0x12000, scoped, tag = 'internal scratch']
  %s0 = inlined_call_operand.vmem [shape: f32[2,32,256], index: 0, kind: input, shape index: {}]
  %s1 = inlined_call_operand.vmem [shape: bf16[32,32], index: 1, kind: input, shape index: {}]
  %s2 = inlined_call_operand.vmem [shape: f32[2,32,2], index: 2, kind: output, shape index: {}]
  %s3 = sld [smem:[#allocation0]]
  $region45: #{dilated_conv_forward.2} parent=0
    _
  %s5 = ssub.s32 1, %s3
  %s6 = scalar_select 0, %s5, %s3
  loop: start=0, step=1, limit=4
  $region2: #{dilated_conv_forward.2} parent=0 // loop_pre_header
    _
  $region3: #{dilated_conv_forward.2} parent=0 // loop_header
    %s8 = sphi 0, %s12
    %p9 = scmp.ge.s32.totalorder %s8, 4
    %s15 = sphi 0, %s27
    %s16 = sphi 0, %s23
    %s17 = sphi 0, %s15
    %s18 = sphi 0, %s16
    %s19 = sphi 0, %s17
    %s20 = sphi 0, %s18
    %s32 = sphi 0, %s34
    %s35 = sphi 0, %s32
    %s36 = sphi 0, %s35
    %s52 = sphi 0, %s36
    %s56 = sphi 0, %s56
    %s58 = sphi 0, %s56
    %s59 = sphi 0, %s58
    %s73 = sphi 0, %s59
    %s79 = sphi 0, %s81
    %s82 = sphi 0, %s79
    %s83 = sphi 0, %s82
    %s99 = sphi 0, %s83
  $region4: #{dilated_conv_forward.2} parent=0 // loop_header_branch
    %11 = sbr.rel (%p9) target = $region8
  $region5: #{dilated_conv_forward.2} parent=0 // loop_body
    %s13 = ssub.s32 %s8, 1
    %s14 = ssub.s32 %s8, 2
    %s21 = sadd.s32 1, %s16
    %p22 = scmp.ge.s32.totalorder %s21, 1
    %s23 = scalar_select %p22, 0, %s21
    %s24 = sadd.s32 1, %s15
    %s25 = scalar_select %p22, %s24, %s15
    %p26 = scmp.ge.s32.totalorder %s25, 2
    %s27 = scalar_select %p26, 0, %s25
    %s28 = ssub.s32 %s15, %s27
    %s29 = ssub.s32 %s16, %s23
    %s30 = sor.u32 %s28, %s29
    %p31 = scmp.eq.s32.totalorder %s30, 0
    %s33 = sadd.s32 %s32, 1
    %s34 = scalar_select %p31, %s32, %s33
    %p37 = pneg %p31
    %p38 = scmp.eq.s32.totalorder %s8, 1
    %p39 = por %p37, %p38
    %p40 = scmp.ne.s32.totalorder %s32, %s35
    %p41 = scmp.eq.s32.totalorder %s8, 0
    %p42 = por %p40, %p41
    %p43 = scmp.ne.s32.totalorder %s32, %s35
    %p44 = scmp.eq.s32.totalorder %s13, 1
    %p45 = por %p43, %p44
    %p46 = scmp.ne.s32.totalorder %s35, %s36
    %p47 = scmp.eq.s32.totalorder %s13, 0
    %p48 = por %p46, %p47
    %p49 = scmp.ne.s32.totalorder %s35, %s36
    %p50 = scmp.eq.s32.totalorder %s14, 1
    %p51 = por %p49, %p50
    %p53 = scmp.ne.s32.totalorder %s36, %s52
    %p54 = scmp.eq.s32.totalorder %s14, 0
    %p55 = por %p53, %p54
    %s57 = sadd.s32 %s56, 1
    %p60 = scmp.eq.s32.totalorder %s8, 1
    %p61 = scmp.ne.s32.totalorder %s56, %s58
    %p62 = scmp.eq.s32.totalorder %s8, 0
    %p63 = por %p61, %p62
    %p64 = scmp.ne.s32.totalorder %s56, %s58
    %p65 = scmp.eq.s32.totalorder %s13, 1
    %p66 = por %p64, %p65
    %p67 = scmp.ne.s32.totalorder %s58, %s59
    %p68 = scmp.eq.s32.totalorder %s13, 0
    %p69 = por %p67, %p68
    %p70 = scmp.ne.s32.totalorder %s58, %s59
    %p71 = scmp.eq.s32.totalorder %s14, 1
    %p72 = por %p70, %p71
    %p74 = scmp.ne.s32.totalorder %s59, %s73
    %p75 = scmp.eq.s32.totalorder %s14, 0
    %p76 = por %p74, %p75
    %s77 = ssub.s32 %s15, %s27
    %p78 = scmp.eq.s32.totalorder %s77, 0
    %s80 = sadd.s32 %s79, 1
    %s81 = scalar_select %p78, %s79, %s80
    %p84 = pneg %p78
    %p85 = scmp.eq.s32.totalorder %s8, 1
    %p86 = por %p84, %p85
    %p87 = scmp.ne.s32.totalorder %s79, %s82
    %p88 = scmp.eq.s32.totalorder %s8, 0
    %p89 = por %p87, %p88
    %p90 = scmp.ne.s32.totalorder %s79, %s82
    %p91 = scmp.eq.s32.totalorder %s13, 1
    %p92 = por %p90, %p91
    %p93 = scmp.ne.s32.totalorder %s82, %s83
    %p94 = scmp.eq.s32.totalorder %s13, 0
    %p95 = por %p93, %p94
    %p96 = scmp.ne.s32.totalorder %s82, %s83
    %p97 = scmp.eq.s32.totalorder %s14, 1
    %p98 = por %p96, %p97
    %p100 = scmp.ne.s32.totalorder %s83, %s99
    %p101 = scmp.eq.s32.totalorder %s14, 0
    %p102 = por %p100, %p101
    %p103 = scmp.le.s32.totalorder 1, %s8
    %p104 = scmp.lt.s32.totalorder %s8, 3
    %p105 = pnand %p103, %p104
    %p106 = pneg %p105
    // Predicated region
    $region9: #{dilated_conv_forward.2} parent=5 // pred_check
      _
    $region10: #{dilated_conv_forward.2} parent=5 // pred_check_branch
      %108 = sbr.rel (%p105) target = $region12
    $region11: #{dilated_conv_forward.2} parent=5 // pred_region
      %s109 = ssub.s32 %s8, 1
      // Predicated region
      $region13: #{dilated_conv_forward.2} parent=11 // pred_check
        %p110 = pneg %p69
      $region14: #{dilated_conv_forward.2} parent=11 // pred_check_branch
        %112 = sbr.rel (%p110) target = $region16
      $region15: #{dilated_conv_forward.2} parent=11 // pred_region
        _
      $region16: #{dilated_conv_forward.2} parent=11 // pred_fallthru
        _
    $region12: #{dilated_conv_forward.2} parent=5 // pred_fallthru
      _
    %p113 = scmp.lt.s32.totalorder %s8, 2
    // Predicated region
    $region17: #{dilated_conv_forward.2} parent=5 // pred_check
      %p114 = pneg %p113
    $region18: #{dilated_conv_forward.2} parent=5 // pred_check_branch
      %116 = sbr.rel (%p114) target = $region20
    $region19: #{dilated_conv_forward.2} parent=5 // pred_region
      // Predicated region
      $region21: #{dilated_conv_forward.2} parent=19 // pred_check
        %p117 = pneg %p42
      $region22: #{dilated_conv_forward.2} parent=19 // pred_check_branch
        %119 = sbr.rel (%p117) target = $region24
      $region23: #{dilated_conv_forward.2} parent=19 // pred_region
        %s120 = smul.u32 2, %s16
        %p121 = scmp.lt.s32.totalorder %s15, 1
        %s122 = scalar_select %p121, %s15, 1
        %p123 = scmp.lt.s32.totalorder %s120, 1
        %s124 = scalar_select %p123, %s120, 1
        %s125 = smul.addr %s122, 8
        %s126 = sadd.s32 %s124, %s125
        %s127 = smul.addr %s126, 8
        %s128 = scalar_lea.vmem %s0, %s127
        %s129 = smul.u32 2, %s16
      $region24: #{dilated_conv_forward.2} parent=19 // pred_fallthru
        _
    $region20: #{dilated_conv_forward.2} parent=5 // pred_fallthru
      _
    %p130 = scmp.le.s32.totalorder 1, %s8
    %p131 = scmp.lt.s32.totalorder %s8, 3
    %p132 = pnand %p130, %p131
    %p133 = pneg %p132
    // Predicated region
    $region25: #{dilated_conv_forward.2} parent=5 // pred_check
      _
    $region26: #{dilated_conv_forward.2} parent=5 // pred_check_branch
      %135 = sbr.rel (%p132) target = $region28
    $region27: #{dilated_conv_forward.2} parent=5 // pred_region
      %s136 = ssub.s32 %s8, 1
      %s137 = smul.u32 2, %s18
      %p138 = scmp.lt.s32.totalorder %s17, 1
      %s139 = scalar_select %p138, %s17, 1
      %p140 = scmp.lt.s32.totalorder %s137, 1
      %s141 = scalar_select %p140, %s137, 1
      %s142 = smul.addr %s139, 8
      %s143 = sadd.s32 %s141, %s142
      %s144 = smul.addr %s143, 8
      %s145 = scalar_lea.vmem %s0, %s144
      %p146 = pneg %p48
      %p147 = pneg %p45
      %p148 = pneg %p69
      %p149 = pneg %p66
      %p150 = pneg %p95
      %p151 = pneg %p92
      %p152 = scmp.lt.s32.totalorder %s17, 1
      %s153 = scalar_select %p152, %s17, 1
      %s154 = smul.addr %s153, 4
      %s155 = smul.addr %s154, 8
      %s156 = scalar_lea.vmem %s2, %s155
      %s157 = smul.u32 2, %s18
      %p158 = scmp.lt.s32.totalorder %s17, 1
      %s159 = scalar_select %p158, %s17, 1
      %p160 = scmp.lt.s32.totalorder %s157, 1
      %s161 = scalar_select %p160, %s157, 1
      %s162 = smul.addr %s159, 8
      %s163 = sadd.s32 %s161, %s162
      %s164 = smul.addr %s163, 8
      %s165 = scalar_lea.vmem %s0, %s164
      %s166 = smul.u32 2, %s18
      %p167 = scmp.lt.s32.totalorder %s17, 1
      %s168 = scalar_select %p167, %s17, 1
      %s169 = smul.addr %s168, 4
      %s170 = smul.addr %s169, 8
      %s171 = scalar_lea.vmem %s2, %s170
      %p173 = scmp.eq.s32.totalorder %s18, 0
      // Predicated region
      $region29: #{dilated_conv_forward.2} parent=27 // pred_check
        %p174 = pneg %p173
      $region30: #{dilated_conv_forward.2} parent=27 // pred_check_branch
        %176 = sbr.rel (%p174) target = $region32
      $region31: #{dilated_conv_forward.2} parent=27 // pred_region
        %vm177 = vcmask 15360
        %178 = vst.msk [vmem:[%s171] sm:$0xff] %vm177, 0.0
        %179 = vst.msk [vmem:[%s171 + $0x8] sm:$0xff] %vm177, 0.0
        %180 = vst.msk [vmem:[%s171 + $0x10] sm:$0xff] %vm177, 0.0
        %181 = vst.msk [vmem:[%s171 + $0x18] sm:$0xff] %vm177, 0.0
      $region32: #{dilated_conv_forward.2} parent=27 // pred_fallthru
        _
      %v182 = vld [vmem:[%s165] sm:$0xff]
      %v183 = vld [vmem:[%s165 + $0x8] sm:$0xff]
      %v184 = vld [vmem:[%s165 + $0x10] sm:$0xff]
      %v185 = vld [vmem:[%s165 + $0x18] sm:$0xff]
      %v186 = vld [vmem:[%s165 + $0x20] sm:$0xff]
      %v187 = vld [vmem:[%s165 + $0x28] sm:$0xff]
      %v188 = vld [vmem:[%s165 + $0x30] sm:$0xff]
      %v189 = vld [vmem:[%s165 + $0x38] sm:$0xff]
      %v190 = vld [vmem:[%s1] sm:$0xf]
      %v191 = vld [vmem:[%s1 + $0x4] sm:$0xf]
      %v192 = vld [vmem:[%s1 + $0x8] sm:$0xf]
      %v193 = vld [vmem:[%s1 + $0xc] sm:$0xf]
      %v194 = vpack.c.bf16 %v184, %v182
      %v195 = vpack.c.bf16 %v185, %v183
      %v196 = vpack.c.bf16 %v188, %v186
      %v197 = vpack.c.bf16 %v189, %v187
      %v202 = vunpack.c.l.b16 %v190
      %v203 = vunpack.c.l.b16 %v191
      %v204 = vunpack.c.l.b16 %v192
      %v205 = vunpack.c.l.b16 %v193
      %v206 = vpack.c.b16 %v203, %v202
      %v207 = vpack.c.b16 %v205, %v204
      %vm208 = vcmask 261120
      %v210 = vsel %vm208, %v206, 0
      %v213 = vsel %vm208, %v207, 0
      %215 = vmatprep.subr.bf16.mxu0 0
      %216 = vmatpush1.bf16.msra.mxu0 0
      %217 = vmatprep.subr.bf16.mxu0 0
      %218 = vmatpush1.bf16.msra.mxu0 0
      %219 = vmatprep.subr.bf16.mxu0 0
      %220 = vmatpush1.bf16.msra.mxu0 0
      %221 = vmatprep.subr.bf16.mxu0 0
      %222 = vmatpush1.bf16.msra.mxu0 0
      %223 = vmatprep.subr.bf16.mxu0 0
      %224 = vmatpush1.bf16.msra.mxu0 0
      %225 = vmatprep.subr.bf16.mxu0 0
      %226 = vmatpush1.bf16.msra.mxu0 0
      %227 = vmatprep.subr.bf16.mxu0 %v197
      %228 = vmatpush1.bf16.msra.mxu0 %v196
      %229 = vmatprep.subr.bf16.mxu0 %v195
      %230 = vmatpush1.bf16.msra.mxu0 %v194
      %231 = vmatprep.subr.bf16.mxu0 0
      %232 = vmatpush2.bf16.msra.mxu0 0
      %233 = vmatprep.subr.bf16.mxu0 0
      %234 = vmatpush2.bf16.msra.mxu0 0
      %235 = vmatprep.subr.bf16.mxu0 0
      %236 = vmatpush2.bf16.msra.mxu0 0
      %237 = vmatprep.subr.bf16.mxu0 0
      %238 = vmatpush2.bf16.msra.mxu0 0
      %239 = vmatprep.subr.bf16.mxu0 0
      %240 = vmatpush2.bf16.msra.mxu0 0
      %241 = vmatprep.subr.bf16.mxu0 0
      %242 = vmatpush2.bf16.msra.mxu0 0
      %243 = vmatprep.subr.bf16.mxu0 0
      %244 = vmatpush2.bf16.msra.mxu0 0
      %245 = vmatprep.subr.bf16.mxu0 0
      %246 = vmatpush2.bf16.msra.mxu0 0
      %247 = vmatprep.mubr.bf16.mxu0 0
      %248 = vmatmul.mubr.bf16.gmra.mxu0 %v210
      %v249 = vpop.f32.mrf.mxu0
      %v250 = vadd.f32 0.0, %v249
      %v251 = vpop.f32.mrf.mxu0
      %v252 = vadd.f32 0.0, %v251
      %v253 = vpop.f32.mrf.mxu0
      %v254 = vadd.f32 0.0, %v253
      %v255 = vpop.f32.mrf.mxu0
      %v256 = vadd.f32 0.0, %v255
      %257 = vmatprep.mubr.bf16.mxu0 0
      %258 = vmatmul.mubr.bf16.gmra.mxu0 %v213
      %v259 = vpop.f32.mrf.mxu0
      %v260 = vadd.f32 0.0, %v259
      %v261 = vpop.f32.mrf.mxu0
      %v262 = vadd.f32 0.0, %v261
      %v263 = vpop.f32.mrf.mxu0
      %v264 = vadd.f32 0.0, %v263
      %v265 = vpop.f32.mrf.mxu0
      %v266 = vadd.f32 0.0, %v265
      %267 = vdwg.mxu0
      %v268 = vadd.f32 %v250, %v252
      %269 = vadd.xlane.f32.xlu0 %v268
      %v270 = vpop.xlane.xlu0 %269
      %v271 = vadd.f32 %v254, %v256
      %272 = vadd.xlane.f32.xlu0 %v271
      %v273 = vpop.xlane.xlu0 %272
      %v274 = vadd.f32 %v260, %v262
      %275 = vadd.xlane.f32.xlu0 %v274
      %v276 = vpop.xlane.xlu0 %275
      %v277 = vadd.f32 %v264, %v266
      %278 = vadd.xlane.f32.xlu0 %v277
      %v279 = vpop.xlane.xlu0 %278
      %v280 = vmul.f32 %v250, %v250
      %v281 = vmul.f32 %v252, %v252
      %v282 = vmul.f32 %v254, %v254
      %v283 = vmul.f32 %v256, %v256
      %v284 = vmul.f32 %v260, %v260
      %v285 = vmul.f32 %v262, %v262
      %v286 = vmul.f32 %v264, %v264
      %v287 = vmul.f32 %v266, %v266
      %v288 = vadd.f32 %v280, %v281
      %289 = vadd.xlane.f32.xlu0 %v288
      %v290 = vpop.xlane.xlu0 %289
      %v291 = vadd.f32 %v282, %v283
      %292 = vadd.xlane.f32.xlu0 %v291
      %v293 = vpop.xlane.xlu0 %292
      %v294 = vadd.f32 %v284, %v285
      %295 = vadd.xlane.f32.xlu0 %v294
      %v296 = vpop.xlane.xlu0 %295
      %v297 = vadd.f32 %v286, %v287
      %298 = vadd.xlane.f32.xlu0 %v297
      %v299 = vpop.xlane.xlu0 %298
      %vm300 = vcmask 7168
      %v301 = vsel %vm300, %v270, %v290
      %v302 = vsel %vm300, %v273, %v293
      %v303 = vsel %vm300, %v276, %v296
      %v304 = vsel %vm300, %v279, %v299
      %v305 = vld [vmem:[%s171] sm:$0xff]
      %v306 = vld [vmem:[%s171 + $0x8] sm:$0xff]
      %v307 = vld [vmem:[%s171 + $0x10] sm:$0xff]
      %v308 = vld [vmem:[%s171 + $0x18] sm:$0xff]
      %v309 = vadd.f32 %v305, %v301
      %v310 = vadd.f32 %v306, %v302
      %v311 = vadd.f32 %v307, %v303
      %v312 = vadd.f32 %v308, %v304
      %vm313 = vcmask 15360
      %314 = vst.msk [vmem:[%s171] sm:$0xff] %vm313, %v309
      %315 = vst.msk [vmem:[%s171 + $0x8] sm:$0xff] %vm313, %v310
      %316 = vst.msk [vmem:[%s171 + $0x10] sm:$0xff] %vm313, %v311
      %317 = vst.msk [vmem:[%s171 + $0x18] sm:$0xff] %vm313, %v312
      %p318 = scmp.lt.s32.totalorder %s17, 1
      %s319 = scalar_select %p318, %s17, 1
      %s320 = smul.addr %s319, 4
      %s321 = smul.addr %s320, 8
      %s322 = scalar_lea.vmem %s2, %s321
      // Predicated region
      $region33: #{dilated_conv_forward.2} parent=27 // pred_check
        %p323 = pneg %p92
      $region34: #{dilated_conv_forward.2} parent=27 // pred_check_branch
        %325 = sbr.rel (%p323) target = $region36
      $region35: #{dilated_conv_forward.2} parent=27 // pred_region
        _
      $region36: #{dilated_conv_forward.2} parent=27 // pred_fallthru
        _
    $region28: #{dilated_conv_forward.2} parent=5 // pred_fallthru
      _
    %p326 = scmp.le.s32.totalorder 2, %s8
    // Predicated region
    $region37: #{dilated_conv_forward.2} parent=5 // pred_check
      %p327 = pneg %p326
    $region38: #{dilated_conv_forward.2} parent=5 // pred_check_branch
      %329 = sbr.rel (%p327) target = $region40
    $region39: #{dilated_conv_forward.2} parent=5 // pred_region
      %s330 = ssub.s32 %s8, 2
      // Predicated region
      $region41: #{dilated_conv_forward.2} parent=39 // pred_check
        %p331 = pneg %p98
      $region42: #{dilated_conv_forward.2} parent=39 // pred_check_branch
        %333 = sbr.rel (%p331) target = $region44
      $region43: #{dilated_conv_forward.2} parent=39 // pred_region
        %p334 = scmp.lt.s32.totalorder %s19, 1
        %s335 = scalar_select %p334, %s19, 1
        %s336 = smul.addr %s335, 4
        %s337 = smul.addr %s336, 8
        %s338 = scalar_lea.vmem %s2, %s337
      $region44: #{dilated_conv_forward.2} parent=39 // pred_fallthru
        _
    $region40: #{dilated_conv_forward.2} parent=5 // pred_fallthru
      _
  $region6: #{dilated_conv_forward.2} parent=0 // loop_footer
    %s12 = sadd.s32 1, %s8
  $region7: #{dilated_conv_forward.2} parent=0 // loop_footer_branch
    %7 = sbr.rel target = $region3
  $region8: #{dilated_conv_forward.2} parent=0 // loop_exit
    _

// kernel: dilated_conv_forward.3
$region0: #{dilated_conv_forward.3}
  #allocation0 [shape = 'u32[]', space=smem, size = 0x4, offset = 0x4, fixed_abs, tag = 'smem constant byte address 0x4 - core index']
  #allocation1 [shape = 'u32[144,128]{1,0:T(1,128)}', space=vmem, size = 0x12000, scoped, tag = 'internal scratch']
  %s0 = inlined_call_operand.vmem [shape: f32[2,32,256], index: 0, kind: input, shape index: {}]
  %s1 = inlined_call_operand.vmem [shape: bf16[192,32], index: 1, kind: input, shape index: {}]
  %s2 = inlined_call_operand.vmem [shape: f32[192,1], index: 2, kind: input, shape index: {}]
  %s3 = inlined_call_operand.vmem [shape: bf16[32,192], index: 3, kind: input, shape index: {}]
  %s4 = inlined_call_operand.vmem [shape: f32[32,1], index: 4, kind: input, shape index: {}]
  %s5 = inlined_call_operand.vmem [shape: f32[2,32,256], index: 5, kind: output, shape index: {}]
  %s6 = sld [smem:[#allocation0]]
  $region53: #{dilated_conv_forward.3} parent=0
    _
  %s8 = ssub.s32 1, %s6
  %s9 = scalar_select 0, %s8, %s6
  loop: start=0, step=1, limit=4
  $region2: #{dilated_conv_forward.3} parent=0 // loop_pre_header
    _
  $region3: #{dilated_conv_forward.3} parent=0 // loop_header
    %s11 = sphi 0, %s15
    %p12 = scmp.ge.s32.totalorder %s11, 4
    %s18 = sphi 0, %s30
    %s19 = sphi 0, %s26
    %s20 = sphi 0, %s18
    %s21 = sphi 0, %s19
    %s22 = sphi 0, %s20
    %s23 = sphi 0, %s21
    %s35 = sphi 0, %s37
    %s38 = sphi 0, %s35
    %s39 = sphi 0, %s38
    %s55 = sphi 0, %s39
    %s59 = sphi 0, %s59
    %s61 = sphi 0, %s59
    %s62 = sphi 0, %s61
    %s76 = sphi 0, %s62
    %s80 = sphi 0, %s80
    %s82 = sphi 0, %s80
    %s83 = sphi 0, %s82
    %s97 = sphi 0, %s83
    %s101 = sphi 0, %s101
    %s103 = sphi 0, %s101
    %s104 = sphi 0, %s103
    %s118 = sphi 0, %s104
    %s122 = sphi 0, %s122
    %s124 = sphi 0, %s122
    %s125 = sphi 0, %s124
    %s139 = sphi 0, %s125
    %s147 = sphi 0, %s149
    %s150 = sphi 0, %s147
    %s151 = sphi 0, %s150
    %s167 = sphi 0, %s151
  $region4: #{dilated_conv_forward.3} parent=0 // loop_header_branch
    %14 = sbr.rel (%p12) target = $region8
  $region5: #{dilated_conv_forward.3} parent=0 // loop_body
    %s16 = ssub.s32 %s11, 1
    %s17 = ssub.s32 %s11, 2
    %s24 = sadd.s32 1, %s19
    %p25 = scmp.ge.s32.totalorder %s24, 1
    %s26 = scalar_select %p25, 0, %s24
    %s27 = sadd.s32 1, %s18
    %s28 = scalar_select %p25, %s27, %s18
    %p29 = scmp.ge.s32.totalorder %s28, 2
    %s30 = scalar_select %p29, 0, %s28
    %s31 = ssub.s32 %s18, %s30
    %s32 = ssub.s32 %s19, %s26
    %s33 = sor.u32 %s31, %s32
    %p34 = scmp.eq.s32.totalorder %s33, 0
    %s36 = sadd.s32 %s35, 1
    %s37 = scalar_select %p34, %s35, %s36
    %p40 = pneg %p34
    %p41 = scmp.eq.s32.totalorder %s11, 1
    %p42 = por %p40, %p41
    %p43 = scmp.ne.s32.totalorder %s35, %s38
    %p44 = scmp.eq.s32.totalorder %s11, 0
    %p45 = por %p43, %p44
    %p46 = scmp.ne.s32.totalorder %s35, %s38
    %p47 = scmp.eq.s32.totalorder %s16, 1
    %p48 = por %p46, %p47
    %p49 = scmp.ne.s32.totalorder %s38, %s39
    %p50 = scmp.eq.s32.totalorder %s16, 0
    %p51 = por %p49, %p50
    %p52 = scmp.ne.s32.totalorder %s38, %s39
    %p53 = scmp.eq.s32.totalorder %s17, 1
    %p54 = por %p52, %p53
    %p56 = scmp.ne.s32.totalorder %s39, %s55
    %p57 = scmp.eq.s32.totalorder %s17, 0
    %p58 = por %p56, %p57
    %s60 = sadd.s32 %s59, 1
    %p63 = scmp.eq.s32.totalorder %s11, 1
    %p64 = scmp.ne.s32.totalorder %s59, %s61
    %p65 = scmp.eq.s32.totalorder %s11, 0
    %p66 = por %p64, %p65
    %p67 = scmp.ne.s32.totalorder %s59, %s61
    %p68 = scmp.eq.s32.totalorder %s16, 1
    %p69 = por %p67, %p68
    %p70 = scmp.ne.s32.totalorder %s61, %s62
    %p71 = scmp.eq.s32.totalorder %s16, 0
    %p72 = por %p70, %p71
    %p73 = scmp.ne.s32.totalorder %s61, %s62
    %p74 = scmp.eq.s32.totalorder %s17, 1
    %p75 = por %p73, %p74
    %p77 = scmp.ne.s32.totalorder %s62, %s76
    %p78 = scmp.eq.s32.totalorder %s17, 0
    %p79 = por %p77, %p78
    %s81 = sadd.s32 %s80, 1
    %p84 = scmp.eq.s32.totalorder %s11, 1
    %p85 = scmp.ne.s32.totalorder %s80, %s82
    %p86 = scmp.eq.s32.totalorder %s11, 0
    %p87 = por %p85, %p86
    %p88 = scmp.ne.s32.totalorder %s80, %s82
    %p89 = scmp.eq.s32.totalorder %s16, 1
    %p90 = por %p88, %p89
    %p91 = scmp.ne.s32.totalorder %s82, %s83
    %p92 = scmp.eq.s32.totalorder %s16, 0
    %p93 = por %p91, %p92
    %p94 = scmp.ne.s32.totalorder %s82, %s83
    %p95 = scmp.eq.s32.totalorder %s17, 1
    %p96 = por %p94, %p95
    %p98 = scmp.ne.s32.totalorder %s83, %s97
    %p99 = scmp.eq.s32.totalorder %s17, 0
    %p100 = por %p98, %p99
    %s102 = sadd.s32 %s101, 1
    %p105 = scmp.eq.s32.totalorder %s11, 1
    %p106 = scmp.ne.s32.totalorder %s101, %s103
    %p107 = scmp.eq.s32.totalorder %s11, 0
    %p108 = por %p106, %p107
    %p109 = scmp.ne.s32.totalorder %s101, %s103
    %p110 = scmp.eq.s32.totalorder %s16, 1
    %p111 = por %p109, %p110
    %p112 = scmp.ne.s32.totalorder %s103, %s104
    %p113 = scmp.eq.s32.totalorder %s16, 0
    %p114 = por %p112, %p113
    %p115 = scmp.ne.s32.totalorder %s103, %s104
    %p116 = scmp.eq.s32.totalorder %s17, 1
    %p117 = por %p115, %p116
    %p119 = scmp.ne.s32.totalorder %s104, %s118
    %p120 = scmp.eq.s32.totalorder %s17, 0
    %p121 = por %p119, %p120
    %s123 = sadd.s32 %s122, 1
    %p126 = scmp.eq.s32.totalorder %s11, 1
    %p127 = scmp.ne.s32.totalorder %s122, %s124
    %p128 = scmp.eq.s32.totalorder %s11, 0
    %p129 = por %p127, %p128
    %p130 = scmp.ne.s32.totalorder %s122, %s124
    %p131 = scmp.eq.s32.totalorder %s16, 1
    %p132 = por %p130, %p131
    %p133 = scmp.ne.s32.totalorder %s124, %s125
    %p134 = scmp.eq.s32.totalorder %s16, 0
    %p135 = por %p133, %p134
    %p136 = scmp.ne.s32.totalorder %s124, %s125
    %p137 = scmp.eq.s32.totalorder %s17, 1
    %p138 = por %p136, %p137
    %p140 = scmp.ne.s32.totalorder %s125, %s139
    %p141 = scmp.eq.s32.totalorder %s17, 0
    %p142 = por %p140, %p141
    %s143 = ssub.s32 %s18, %s30
    %s144 = ssub.s32 %s19, %s26
    %s145 = sor.u32 %s143, %s144
    %p146 = scmp.eq.s32.totalorder %s145, 0
    %s148 = sadd.s32 %s147, 1
    %s149 = scalar_select %p146, %s147, %s148
    %p152 = pneg %p146
    %p153 = scmp.eq.s32.totalorder %s11, 1
    %p154 = por %p152, %p153
    %p155 = scmp.ne.s32.totalorder %s147, %s150
    %p156 = scmp.eq.s32.totalorder %s11, 0
    %p157 = por %p155, %p156
    %p158 = scmp.ne.s32.totalorder %s147, %s150
    %p159 = scmp.eq.s32.totalorder %s16, 1
    %p160 = por %p158, %p159
    %p161 = scmp.ne.s32.totalorder %s150, %s151
    %p162 = scmp.eq.s32.totalorder %s16, 0
    %p163 = por %p161, %p162
    %p164 = scmp.ne.s32.totalorder %s150, %s151
    %p165 = scmp.eq.s32.totalorder %s17, 1
    %p166 = por %p164, %p165
    %p168 = scmp.ne.s32.totalorder %s151, %s167
    %p169 = scmp.eq.s32.totalorder %s17, 0
    %p170 = por %p168, %p169
    %p171 = scmp.le.s32.totalorder 1, %s11
    %p172 = scmp.lt.s32.totalorder %s11, 3
    %p173 = pnand %p171, %p172
    %p174 = pneg %p173
    // Predicated region
    $region9: #{dilated_conv_forward.3} parent=5 // pred_check
      _
    $region10: #{dilated_conv_forward.3} parent=5 // pred_check_branch
      %176 = sbr.rel (%p173) target = $region12
    $region11: #{dilated_conv_forward.3} parent=5 // pred_region
      %s177 = ssub.s32 %s11, 1
      // Predicated region
      $region13: #{dilated_conv_forward.3} parent=11 // pred_check
        %p178 = pneg %p72
      $region14: #{dilated_conv_forward.3} parent=11 // pred_check_branch
        %180 = sbr.rel (%p178) target = $region16
      $region15: #{dilated_conv_forward.3} parent=11 // pred_region
        _
      $region16: #{dilated_conv_forward.3} parent=11 // pred_fallthru
        _
      // Predicated region
      $region17: #{dilated_conv_forward.3} parent=11 // pred_check
        %p181 = pneg %p93
      $region18: #{dilated_conv_forward.3} parent=11 // pred_check_branch
        %183 = sbr.rel (%p181) target = $region20
      $region19: #{dilated_conv_forward.3} parent=11 // pred_region
        _
      $region20: #{dilated_conv_forward.3} parent=11 // pred_fallthru
        _
      // Predicated region
      $region21: #{dilated_conv_forward.3} parent=11 // pred_check
        %p184 = pneg %p114
      $region22: #{dilated_conv_forward.3} parent=11 // pred_check_branch
        %186 = sbr.rel (%p184) target = $region24
      $region23: #{dilated_conv_forward.3} parent=11 // pred_region
        _
      $region24: #{dilated_conv_forward.3} parent=11 // pred_fallthru
        _
      // Predicated region
      $region25: #{dilated_conv_forward.3} parent=11 // pred_check
        %p187 = pneg %p135
      $region26: #{dilated_conv_forward.3} parent=11 // pred_check_branch
        %189 = sbr.rel (%p187) target = $region28
      $region27: #{dilated_conv_forward.3} parent=11 // pred_region
        _
      $region28: #{dilated_conv_forward.3} parent=11 // pred_fallthru
        _
    $region12: #{dilated_conv_forward.3} parent=5 // pred_fallthru
      _
    %p190 = scmp.lt.s32.totalorder %s11, 2
    // Predicated region
    $region29: #{dilated_conv_forward.3} parent=5 // pred_check
      %p191 = pneg %p190
    $region30: #{dilated_conv_forward.3} parent=5 // pred_check_branch
      %193 = sbr.rel (%p191) target = $region32
    $region31: #{dilated_conv_forward.3} parent=5 // pred_region
      // Predicated region
      $region33: #{dilated_conv_forward.3} parent=31 // pred_check
        %p194 = pneg %p45
      $region34: #{dilated_conv_forward.3} parent=31 // pred_check_branch
        %196 = sbr.rel (%p194) target = $region36
      $region35: #{dilated_conv_forward.3} parent=31 // pred_region
        %s197 = smul.u32 2, %s19
        %p198 = scmp.lt.s32.totalorder %s18, 1
        %s199 = scalar_select %p198, %s18, 1
        %p200 = scmp.lt.s32.totalorder %s197, 1
        %s201 = scalar_select %p200, %s197, 1
        %s202 = smul.addr %s199, 8
        %s203 = sadd.s32 %s201, %s202
        %s204 = smul.addr %s203, 8
        %s205 = scalar_lea.vmem %s0, %s204
        %s206 = smul.u32 2, %s19
      $region36: #{dilated_conv_forward.3} parent=31 // pred_fallthru
        _
    $region32: #{dilated_conv_forward.3} parent=5 // pred_fallthru
      _
    %p207 = scmp.le.s32.totalorder 1, %s11
    %p208 = scmp.lt.s32.totalorder %s11, 3
    %p209 = pnand %p207, %p208
    %p210 = pneg %p209
    // Predicated region
    $region37: #{dilated_conv_forward.3} parent=5 // pred_check
      _
    $region38: #{dilated_conv_forward.3} parent=5 // pred_check_branch
      %212 = sbr.rel (%p209) target = $region40
    $region39: #{dilated_conv_forward.3} parent=5 // pred_region
      %s213 = ssub.s32 %s11, 1
      %s214 = smul.u32 2, %s21
      %p215 = scmp.lt.s32.totalorder %s20, 1
      %s216 = scalar_select %p215, %s20, 1
      %p217 = scmp.lt.s32.totalorder %s214, 1
      %s218 = scalar_select %p217, %s214, 1
      %s219 = smul.addr %s216, 8
      %s220 = sadd.s32 %s218, %s219
      %s221 = smul.addr %s220, 8
      %s222 = scalar_lea.vmem %s0, %s221
      %p223 = pneg %p51
      %p224 = pneg %p48
      %p225 = pneg %p72
      %p226 = pneg %p69
      %p227 = pneg %p93
      %p228 = pneg %p90
      %p229 = pneg %p114
      %p230 = pneg %p111
      %p231 = pneg %p135
      %p232 = pneg %p132
      %p233 = pneg %p163
      %p234 = pneg %p160
      %s235 = smul.u32 2, %s21
      %p236 = scmp.lt.s32.totalorder %s20, 1
      %s237 = scalar_select %p236, %s20, 1
      %p238 = scmp.lt.s32.totalorder %s235, 1
      %s239 = scalar_select %p238, %s235, 1
      %s240 = smul.addr %s237, 8
      %s241 = sadd.s32 %s239, %s240
      %s242 = smul.addr %s241, 8
      %s243 = scalar_lea.vmem %s5, %s242
      %s244 = smul.u32 2, %s21
      %p245 = scmp.lt.s32.totalorder %s20, 1
      %s246 = scalar_select %p245, %s20, 1
      %p247 = scmp.lt.s32.totalorder %s244, 1
      %s248 = scalar_select %p247, %s244, 1
      %s249 = smul.addr %s246, 8
      %s250 = sadd.s32 %s248, %s249
      %s251 = smul.addr %s250, 8
      %s252 = scalar_lea.vmem %s0, %s251
      %s253 = smul.u32 2, %s21
      %s254 = smul.u32 2, %s21
      %p255 = scmp.lt.s32.totalorder %s20, 1
      %s256 = scalar_select %p255, %s20, 1
      %p257 = scmp.lt.s32.totalorder %s254, 1
      %s258 = scalar_select %p257, %s254, 1
      %s259 = smul.addr %s256, 8
      %s260 = sadd.s32 %s258, %s259
      %s261 = smul.addr %s260, 8
      %s262 = scalar_lea.vmem %s5, %s261
      %s263 = smul.u32 2, %s21
      %v265 = vld [vmem:[%s252] sm:$0xff]
      %v266 = vld [vmem:[%s252 + $0x8] sm:$0xff]
      %v267 = vld [vmem:[%s252 + $0x10] sm:$0xff]
      %v268 = vld [vmem:[%s252 + $0x18] sm:$0xff]
      %v269 = vld [vmem:[%s252 + $0x20] sm:$0xff]
      %v270 = vld [vmem:[%s252 + $0x28] sm:$0xff]
      %v271 = vld [vmem:[%s252 + $0x30] sm:$0xff]
      %v272 = vld [vmem:[%s252 + $0x38] sm:$0xff]
      %v273 = vpack.c.bf16 %v267, %v265
      %v274 = vpack.c.bf16 %v268, %v266
      %v275 = vpack.c.bf16 %v271, %v269
      %v276 = vpack.c.bf16 %v272, %v270
      %v277 = vld [vmem:[%s1] sm:$0xf]
      %v278 = vld [vmem:[%s1 + $0x4] sm:$0xf]
      %v279 = vld [vmem:[%s1 + $0x8] sm:$0xf]
      %v280 = vld [vmem:[%s1 + $0xc] sm:$0xf]
      %v281 = vld [vmem:[%s1 + $0x10] sm:$0xf]
      %v282 = vld [vmem:[%s1 + $0x14] sm:$0xf]
      %v283 = vld [vmem:[%s1 + $0x18] sm:$0xf]
      %v284 = vld [vmem:[%s1 + $0x1c] sm:$0xf]
      %v285 = vld [vmem:[%s1 + $0x20] sm:$0xf]
      %v286 = vld [vmem:[%s1 + $0x24] sm:$0xf]
      %v287 = vld [vmem:[%s1 + $0x28] sm:$0xf]
      %v288 = vld [vmem:[%s1 + $0x2c] sm:$0xf]
      %v289 = vld [vmem:[%s1 + $0x30] sm:$0xf]
      %v290 = vld [vmem:[%s1 + $0x34] sm:$0xf]
      %v291 = vld [vmem:[%s1 + $0x38] sm:$0xf]
      %v292 = vld [vmem:[%s1 + $0x3c] sm:$0xf]
      %v293 = vld [vmem:[%s1 + $0x40] sm:$0xf]
      %v294 = vld [vmem:[%s1 + $0x44] sm:$0xf]
      %v295 = vld [vmem:[%s1 + $0x48] sm:$0xf]
      %v296 = vld [vmem:[%s1 + $0x4c] sm:$0xf]
      %v297 = vld [vmem:[%s1 + $0x50] sm:$0xf]
      %v298 = vld [vmem:[%s1 + $0x54] sm:$0xf]
      %v299 = vld [vmem:[%s1 + $0x58] sm:$0xf]
      %v300 = vld [vmem:[%s1 + $0x5c] sm:$0xf]
      %v301 = vld [vmem:[%s2] sm:$0xff]
      %v302 = vld [vmem:[%s2 + $0x8] sm:$0xff]
      %v303 = vld [vmem:[%s2 + $0x10] sm:$0xff]
      %v304 = vld [vmem:[%s2 + $0x18] sm:$0xff]
      %v305 = vld [vmem:[%s2 + $0x20] sm:$0xff]
      %v306 = vld [vmem:[%s2 + $0x28] sm:$0xff]
      %v307 = vld [vmem:[%s2 + $0x30] sm:$0xff]
      %v308 = vld [vmem:[%s2 + $0x38] sm:$0xff]
      %v309 = vld [vmem:[%s2 + $0x40] sm:$0xff]
      %v310 = vld [vmem:[%s2 + $0x48] sm:$0xff]
      %v311 = vld [vmem:[%s2 + $0x50] sm:$0xff]
      %v312 = vld [vmem:[%s2 + $0x58] sm:$0xff]
      %v313 = vld [vmem:[%s2 + $0x60] sm:$0xff]
      %v314 = vld [vmem:[%s2 + $0x68] sm:$0xff]
      %v315 = vld [vmem:[%s2 + $0x70] sm:$0xff]
      %v316 = vld [vmem:[%s2 + $0x78] sm:$0xff]
      %v317 = vld [vmem:[%s2 + $0x80] sm:$0xff]
      %v318 = vld [vmem:[%s2 + $0x88] sm:$0xff]
      %v319 = vld [vmem:[%s2 + $0x90] sm:$0xff]
      %v320 = vld [vmem:[%s2 + $0x98] sm:$0xff]
      %v321 = vld [vmem:[%s2 + $0xa0] sm:$0xff]
      %v322 = vld [vmem:[%s2 + $0xa8] sm:$0xff]
      %v323 = vld [vmem:[%s2 + $0xb0] sm:$0xff]
      %v324 = vld [vmem:[%s2 + $0xb8] sm:$0xff]
      %v325 = vld [vmem:[%s3] sm:$0xff]
      %v326 = vld [vmem:[%s3 + $0x8] sm:$0xff]
      %v327 = vld [vmem:[%s3 + $0x10] sm:$0xff]
      %v328 = vld [vmem:[%s3 + $0x18] sm:$0xff]
      %330 = vset.pattern.permute.xlu0 0
      %331 = vperm.xlu0 %330, %v301
      %v332 = vpop.permute.xlu0 %331
      %335 = vset.pattern.permute.xlu0 0
      %336 = vperm.xlu0 %335, %v302
      %v337 = vpop.permute.xlu0 %336
      %340 = vset.pattern.permute.xlu0 0
      %341 = vperm.xlu0 %340, %v303
      %v342 = vpop.permute.xlu0 %341
      %345 = vset.pattern.permute.xlu0 0
      %346 = vperm.xlu0 %345, %v304
      %v347 = vpop.permute.xlu0 %346
      %350 = vset.pattern.permute.xlu0 0
      %351 = vperm.xlu0 %350, %v305
      %v352 = vpop.permute.xlu0 %351
      %355 = vset.pattern.permute.xlu0 0
      %356 = vperm.xlu0 %355, %v306
      %v357 = vpop.permute.xlu0 %356
      %360 = vset.pattern.permute.xlu0 0
      %361 = vperm.xlu0 %360, %v307
      %v362 = vpop.permute.xlu0 %361
      %365 = vset.pattern.permute.xlu0 0
      %366 = vperm.xlu0 %365, %v308
      %v367 = vpop.permute.xlu0 %366
      %370 = vset.pattern.permute.xlu0 0
      %371 = vperm.xlu0 %370, %v309
      %v372 = vpop.permute.xlu0 %371
      %375 = vset.pattern.permute.xlu0 0
      %376 = vperm.xlu0 %375, %v310
      %v377 = vpop.permute.xlu0 %376
      %380 = vset.pattern.permute.xlu0 0
      %381 = vperm.xlu0 %380, %v311
      %v382 = vpop.permute.xlu0 %381
      %385 = vset.pattern.permute.xlu0 0
      %386 = vperm.xlu0 %385, %v312
      %v387 = vpop.permute.xlu0 %386
      %390 = vset.pattern.permute.xlu0 0
      %391 = vperm.xlu0 %390, %v313
      %v392 = vpop.permute.xlu0 %391
      %395 = vset.pattern.permute.xlu0 0
      %396 = vperm.xlu0 %395, %v314
      %v397 = vpop.permute.xlu0 %396
      %400 = vset.pattern.permute.xlu0 0
      %401 = vperm.xlu0 %400, %v315
      %v402 = vpop.permute.xlu0 %401
      %405 = vset.pattern.permute.xlu0 0
      %406 = vperm.xlu0 %405, %v316
      %v407 = vpop.permute.xlu0 %406
      %410 = vset.pattern.permute.xlu0 0
      %411 = vperm.xlu0 %410, %v317
      %v412 = vpop.permute.xlu0 %411
      %415 = vset.pattern.permute.xlu0 0
      %416 = vperm.xlu0 %415, %v318
      %v417 = vpop.permute.xlu0 %416
      %420 = vset.pattern.permute.xlu0 0
      %421 = vperm.xlu0 %420, %v319
      %v422 = vpop.permute.xlu0 %421
      %425 = vset.pattern.permute.xlu0 0
      %426 = vperm.xlu0 %425, %v320
      %v427 = vpop.permute.xlu0 %426
      %430 = vset.pattern.permute.xlu0 0
      %431 = vperm.xlu0 %430, %v321
      %v432 = vpop.permute.xlu0 %431
      %435 = vset.pattern.permute.xlu0 0
      %436 = vperm.xlu0 %435, %v322
      %v437 = vpop.permute.xlu0 %436
      %440 = vset.pattern.permute.xlu0 0
      %441 = vperm.xlu0 %440, %v323
      %v442 = vpop.permute.xlu0 %441
      %445 = vset.pattern.permute.xlu0 0
      %446 = vperm.xlu0 %445, %v324
      %v447 = vpop.permute.xlu0 %446
      %v473 = vunpack.c.l.b16 %v277
      %v474 = vunpack.c.l.b16 %v278
      %v475 = vunpack.c.l.b16 %v279
      %v476 = vunpack.c.l.b16 %v280
      %v477 = vunpack.c.l.b16 %v281
      %v478 = vunpack.c.l.b16 %v282
      %v479 = vunpack.c.l.b16 %v283
      %v480 = vunpack.c.l.b16 %v284
      %v481 = vunpack.c.l.b16 %v285
      %v482 = vunpack.c.l.b16 %v286
      %v483 = vunpack.c.l.b16 %v287
      %v484 = vunpack.c.l.b16 %v288
      %v485 = vunpack.c.l.b16 %v289
      %v486 = vunpack.c.l.b16 %v290
      %v487 = vunpack.c.l.b16 %v291
      %v488 = vunpack.c.l.b16 %v292
      %v489 = vunpack.c.l.b16 %v293
      %v490 = vunpack.c.l.b16 %v294
      %v491 = vunpack.c.l.b16 %v295
      %v492 = vunpack.c.l.b16 %v296
      %v493 = vunpack.c.l.b16 %v297
      %v494 = vunpack.c.l.b16 %v298
      %v495 = vunpack.c.l.b16 %v299
      %v496 = vunpack.c.l.b16 %v300
      %v497 = vpack.c.b16 %v474, %v473
      %v498 = vpack.c.b16 %v476, %v475
      %v499 = vpack.c.b16 %v478, %v477
      %v500 = vpack.c.b16 %v480, %v479
      %v501 = vpack.c.b16 %v482, %v481
      %v502 = vpack.c.b16 %v484, %v483
      %v503 = vpack.c.b16 %v486, %v485
      %v504 = vpack.c.b16 %v488, %v487
      %v505 = vpack.c.b16 %v490, %v489
      %v506 = vpack.c.b16 %v492, %v491
      %v507 = vpack.c.b16 %v494, %v493
      %v508 = vpack.c.b16 %v496, %v495
      %vm509 = vcmask 261120
      %v511 = vsel %vm509, %v497, 0
      %v514 = vsel %vm509, %v498, 0
      %v517 = vsel %vm509, %v499, 0
      %v520 = vsel %vm509, %v500, 0
      %v523 = vsel %vm509, %v501, 0
      %v526 = vsel %vm509, %v502, 0
      %v529 = vsel %vm509, %v503, 0
      %v532 = vsel %vm509, %v504, 0
      %v535 = vsel %vm509, %v505, 0
      %v538 = vsel %vm509, %v506, 0
      %v541 = vsel %vm509, %v507, 0
      %v544 = vsel %vm509, %v508, 0
      %546 = vmatprep.subr.bf16.mxu0 0
      %547 = vmatpush1.bf16.msra.mxu0 0
      %548 = vmatprep.subr.bf16.mxu0 0
      %549 = vmatpush1.bf16.msra.mxu0 0
      %550 = vmatprep.subr.bf16.mxu0 0
      %551 = vmatpush1.bf16.msra.mxu0 0
      %552 = vmatprep.subr.bf16.mxu0 0
      %553 = vmatpush1.bf16.msra.mxu0 0
      %554 = vmatprep.subr.bf16.mxu0 0
      %555 = vmatpush1.bf16.msra.mxu0 0
      %556 = vmatprep.subr.bf16.mxu0 0
      %557 = vmatpush1.bf16.msra.mxu0 0
      %558 = vmatprep.subr.bf16.mxu0 %v276
      %559 = vmatpush1.bf16.msra.mxu0 %v275
      %560 = vmatprep.subr.bf16.mxu0 %v274
      %561 = vmatpush1.bf16.msra.mxu0 %v273
      %562 = vmatprep.subr.bf16.mxu0 0
      %563 = vmatpush2.bf16.msra.mxu0 0
      %564 = vmatprep.subr.bf16.mxu0 0
      %565 = vmatpush2.bf16.msra.mxu0 0
      %566 = vmatprep.subr.bf16.mxu0 0
      %567 = vmatpush2.bf16.msra.mxu0 0
      %568 = vmatprep.subr.bf16.mxu0 0
      %569 = vmatpush2.bf16.msra.mxu0 0
      %570 = vmatprep.subr.bf16.mxu0 0
      %571 = vmatpush2.bf16.msra.mxu0 0
      %572 = vmatprep.subr.bf16.mxu0 0
      %573 = vmatpush2.bf16.msra.mxu0 0
      %574 = vmatprep.subr.bf16.mxu0 0
      %575 = vmatpush2.bf16.msra.mxu0 0
      %576 = vmatprep.subr.bf16.mxu0 0
      %577 = vmatpush2.bf16.msra.mxu0 0
      %578 = vmatprep.mubr.bf16.mxu0 0
      %579 = vmatmul.mubr.bf16.gmra.mxu0 %v511
      %v580 = vpop.f32.mrf.mxu0
      %v581 = vadd.f32 %v332, %v580
      %v582 = vpop.f32.mrf.mxu0
      %v583 = vadd.f32 %v332, %v582
      %v584 = vpop.f32.mrf.mxu0
      %v585 = vadd.f32 %v337, %v584
      %v586 = vpop.f32.mrf.mxu0
      %v587 = vadd.f32 %v337, %v586
      %588 = vmatprep.mubr.bf16.mxu0 0
      %589 = vmatmul.mubr.bf16.gmra.mxu0 %v514
      %v590 = vpop.f32.mrf.mxu0
      %v591 = vadd.f32 %v342, %v590
      %v592 = vpop.f32.mrf.mxu0
      %v593 = vadd.f32 %v342, %v592
      %v594 = vpop.f32.mrf.mxu0
      %v595 = vadd.f32 %v347, %v594
      %v596 = vpop.f32.mrf.mxu0
      %v597 = vadd.f32 %v347, %v596
      %598 = vmatprep.mubr.bf16.mxu0 0
      %599 = vmatmul.mubr.bf16.gmra.mxu0 %v517
      %v600 = vpop.f32.mrf.mxu0
      %v601 = vadd.f32 %v352, %v600
      %v602 = vpop.f32.mrf.mxu0
      %v603 = vadd.f32 %v352, %v602
      %v604 = vpop.f32.mrf.mxu0
      %v605 = vadd.f32 %v357, %v604
      %v606 = vpop.f32.mrf.mxu0
      %v607 = vadd.f32 %v357, %v606
      %608 = vmatprep.mubr.bf16.mxu0 0
      %609 = vmatmul.mubr.bf16.gmra.mxu0 %v520
      %v610 = vpop.f32.mrf.mxu0
      %v611 = vadd.f32 %v362, %v610
      %v612 = vpop.f32.mrf.mxu0
      %v613 = vadd.f32 %v362, %v612
      %v614 = vpop.f32.mrf.mxu0
      %v615 = vadd.f32 %v367, %v614
      %v616 = vpop.f32.mrf.mxu0
      %v617 = vadd.f32 %v367, %v616
      %618 = vmatprep.mubr.bf16.mxu0 0
      %619 = vmatmul.mubr.bf16.gmra.mxu0 %v523
      %v620 = vpop.f32.mrf.mxu0
      %v621 = vadd.f32 %v372, %v620
      %v622 = vpop.f32.mrf.mxu0
      %v623 = vadd.f32 %v372, %v622
      %v624 = vpop.f32.mrf.mxu0
      %v625 = vadd.f32 %v377, %v624
      %v626 = vpop.f32.mrf.mxu0
      %v627 = vadd.f32 %v377, %v626
      %628 = vmatprep.mubr.bf16.mxu0 0
      %629 = vmatmul.mubr.bf16.gmra.mxu0 %v526
      %v630 = vpop.f32.mrf.mxu0
      %v631 = vadd.f32 %v382, %v630
      %v632 = vpop.f32.mrf.mxu0
      %v633 = vadd.f32 %v382, %v632
      %v634 = vpop.f32.mrf.mxu0
      %v635 = vadd.f32 %v387, %v634
      %v636 = vpop.f32.mrf.mxu0
      %v637 = vadd.f32 %v387, %v636
      %638 = vmatprep.mubr.bf16.mxu0 0
      %639 = vmatmul.mubr.bf16.gmra.mxu0 %v529
      %v640 = vpop.f32.mrf.mxu0
      %v641 = vadd.f32 %v392, %v640
      %v642 = vpop.f32.mrf.mxu0
      %v643 = vadd.f32 %v392, %v642
      %v644 = vpop.f32.mrf.mxu0
      %v645 = vadd.f32 %v397, %v644
      %v646 = vpop.f32.mrf.mxu0
      %v647 = vadd.f32 %v397, %v646
      %648 = vmatprep.mubr.bf16.mxu0 0
      %649 = vmatmul.mubr.bf16.gmra.mxu0 %v532
      %v650 = vpop.f32.mrf.mxu0
      %v651 = vadd.f32 %v402, %v650
      %v652 = vpop.f32.mrf.mxu0
      %v653 = vadd.f32 %v402, %v652
      %v654 = vpop.f32.mrf.mxu0
      %v655 = vadd.f32 %v407, %v654
      %v656 = vpop.f32.mrf.mxu0
      %v657 = vadd.f32 %v407, %v656
      %658 = vmatprep.mubr.bf16.mxu0 0
      %659 = vmatmul.mubr.bf16.gmra.mxu0 %v535
      %v660 = vpop.f32.mrf.mxu0
      %v661 = vadd.f32 %v412, %v660
      %v662 = vpop.f32.mrf.mxu0
      %v663 = vadd.f32 %v412, %v662
      %v664 = vpop.f32.mrf.mxu0
      %v665 = vadd.f32 %v417, %v664
      %v666 = vpop.f32.mrf.mxu0
      %v667 = vadd.f32 %v417, %v666
      %668 = vmatprep.mubr.bf16.mxu0 0
      %669 = vmatmul.mubr.bf16.gmra.mxu0 %v538
      %v670 = vpop.f32.mrf.mxu0
      %v671 = vadd.f32 %v422, %v670
      %v672 = vpop.f32.mrf.mxu0
      %v673 = vadd.f32 %v422, %v672
      %v674 = vpop.f32.mrf.mxu0
      %v675 = vadd.f32 %v427, %v674
      %v676 = vpop.f32.mrf.mxu0
      %v677 = vadd.f32 %v427, %v676
      %678 = vmatprep.mubr.bf16.mxu0 0
      %679 = vmatmul.mubr.bf16.gmra.mxu0 %v541
      %v680 = vpop.f32.mrf.mxu0
      %v681 = vadd.f32 %v432, %v680
      %v682 = vpop.f32.mrf.mxu0
      %v683 = vadd.f32 %v432, %v682
      %v684 = vpop.f32.mrf.mxu0
      %v685 = vadd.f32 %v437, %v684
      %v686 = vpop.f32.mrf.mxu0
      %v687 = vadd.f32 %v437, %v686
      %688 = vmatprep.mubr.bf16.mxu0 0
      %689 = vmatmul.mubr.bf16.gmra.mxu0 %v544
      %v690 = vpop.f32.mrf.mxu0
      %v691 = vadd.f32 %v442, %v690
      %v692 = vpop.f32.mrf.mxu0
      %v693 = vadd.f32 %v442, %v692
      %v694 = vpop.f32.mrf.mxu0
      %v695 = vadd.f32 %v447, %v694
      %v696 = vpop.f32.mrf.mxu0
      %v697 = vadd.f32 %v447, %v696
      %698 = vdwg.mxu0
      %v699 = vmul.f32 %v581, 0.5
      %v700 = vmul.f32 %v583, 0.5
      %v701 = vmul.f32 %v585, 0.5
      %v702 = vmul.f32 %v587, 0.5
      %v703 = vmul.f32 %v591, 0.5
      %v704 = vmul.f32 %v593, 0.5
      %v705 = vmul.f32 %v595, 0.5
      %v706 = vmul.f32 %v597, 0.5
      %v707 = vmul.f32 %v601, 0.5
      %v708 = vmul.f32 %v603, 0.5
      %v709 = vmul.f32 %v605, 0.5
      %v710 = vmul.f32 %v607, 0.5
      %v711 = vmul.f32 %v611, 0.5
      %v712 = vmul.f32 %v613, 0.5
      %v713 = vmul.f32 %v615, 0.5
      %v714 = vmul.f32 %v617, 0.5
      %v715 = vmul.f32 %v621, 0.5
      %v716 = vmul.f32 %v623, 0.5
      %v717 = vmul.f32 %v625, 0.5
      %v718 = vmul.f32 %v627, 0.5
      %v719 = vmul.f32 %v631, 0.5
      %v720 = vmul.f32 %v633, 0.5
      %v721 = vmul.f32 %v635, 0.5
      %v722 = vmul.f32 %v637, 0.5
      %v723 = vmul.f32 %v641, 0.5
      %v724 = vmul.f32 %v643, 0.5
      %v725 = vmul.f32 %v645, 0.5
      %v726 = vmul.f32 %v647, 0.5
      %v727 = vmul.f32 %v651, 0.5
      %v728 = vmul.f32 %v653, 0.5
      %v729 = vmul.f32 %v655, 0.5
      %v730 = vmul.f32 %v657, 0.5
      %v731 = vmul.f32 %v661, 0.5
      %v732 = vmul.f32 %v663, 0.5
      %v733 = vmul.f32 %v665, 0.5
      %v734 = vmul.f32 %v667, 0.5
      %v735 = vmul.f32 %v671, 0.5
      %v736 = vmul.f32 %v673, 0.5
      %v737 = vmul.f32 %v675, 0.5
      %v738 = vmul.f32 %v677, 0.5
      %v739 = vmul.f32 %v681, 0.5
      %v740 = vmul.f32 %v683, 0.5
      %v741 = vmul.f32 %v685, 0.5
      %v742 = vmul.f32 %v687, 0.5
      %v743 = vmul.f32 %v691, 0.5
      %v744 = vmul.f32 %v693, 0.5
      %v745 = vmul.f32 %v695, 0.5
      %v746 = vmul.f32 %v697, 0.5
      %v747 = vmul.f32 %v581, 0.70710677
      %v748 = vmul.f32 %v583, 0.70710677
      %v749 = vmul.f32 %v585, 0.70710677
      %v750 = vmul.f32 %v587, 0.70710677
      %v751 = vmul.f32 %v591, 0.70710677
      %v752 = vmul.f32 %v593, 0.70710677
      %v753 = vmul.f32 %v595, 0.70710677
      %v754 = vmul.f32 %v597, 0.70710677
      %v755 = vmul.f32 %v601, 0.70710677
      %v756 = vmul.f32 %v603, 0.70710677
      %v757 = vmul.f32 %v605, 0.70710677
      %v758 = vmul.f32 %v607, 0.70710677
      %v759 = vmul.f32 %v611, 0.70710677
      %v760 = vmul.f32 %v613, 0.70710677
      %v761 = vmul.f32 %v615, 0.70710677
      %v762 = vmul.f32 %v617, 0.70710677
      %v763 = vmul.f32 %v621, 0.70710677
      %v764 = vmul.f32 %v623, 0.70710677
      %v765 = vmul.f32 %v625, 0.70710677
      %v766 = vmul.f32 %v627, 0.70710677
      %v767 = vmul.f32 %v631, 0.70710677
      %v768 = vmul.f32 %v633, 0.70710677
      %v769 = vmul.f32 %v635, 0.70710677
      %v770 = vmul.f32 %v637, 0.70710677
      %v771 = vmul.f32 %v641, 0.70710677
      %v772 = vmul.f32 %v643, 0.70710677
      %v773 = vmul.f32 %v645, 0.70710677
      %v774 = vmul.f32 %v647, 0.70710677
      %v775 = vmul.f32 %v651, 0.70710677
      %v776 = vmul.f32 %v653, 0.70710677
      %v777 = vmul.f32 %v655, 0.70710677
      %v778 = vmul.f32 %v657, 0.70710677
      %v779 = vmul.f32 %v661, 0.70710677
      %v780 = vmul.f32 %v663, 0.70710677
      %v781 = vmul.f32 %v665, 0.70710677
      %v782 = vmul.f32 %v667, 0.70710677
      %v783 = vmul.f32 %v671, 0.70710677
      %v784 = vmul.f32 %v673, 0.70710677
      %v785 = vmul.f32 %v675, 0.70710677
      %v786 = vmul.f32 %v677, 0.70710677
      %v787 = vmul.f32 %v681, 0.70710677
      %v788 = vmul.f32 %v683, 0.70710677
      %v789 = vmul.f32 %v685, 0.70710677
      %v790 = vmul.f32 %v687, 0.70710677
      %v791 = vmul.f32 %v691, 0.70710677
      %v792 = vmul.f32 %v693, 0.70710677
      %v793 = vmul.f32 %v695, 0.70710677
      %v794 = vmul.f32 %v697, 0.70710677
      %v795 = verf.f32.pop %v747
      %v796 = verf.f32.pop %v748
      %v797 = verf.f32.pop %v749
      %v798 = verf.f32.pop %v750
      %v799 = verf.f32.pop %v751
      %v800 = verf.f32.pop %v752
      %v801 = verf.f32.pop %v753
      %v802 = verf.f32.pop %v754
      %v803 = verf.f32.pop %v755
      %v804 = verf.f32.pop %v756
      %v805 = verf.f32.pop %v757
      %v806 = verf.f32.pop %v758
      %v807 = verf.f32.pop %v759
      %v808 = verf.f32.pop %v760
      %v809 = verf.f32.pop %v761
      %v810 = verf.f32.pop %v762
      %v811 = verf.f32.pop %v763
      %v812 = verf.f32.pop %v764
      %v813 = verf.f32.pop %v765
      %v814 = verf.f32.pop %v766
      %v815 = verf.f32.pop %v767
      %v816 = verf.f32.pop %v768
      %v817 = verf.f32.pop %v769
      %v818 = verf.f32.pop %v770
      %v819 = verf.f32.pop %v771
      %v820 = verf.f32.pop %v772
      %v821 = verf.f32.pop %v773
      %v822 = verf.f32.pop %v774
      %v823 = verf.f32.pop %v775
      %v824 = verf.f32.pop %v776
      %v825 = verf.f32.pop %v777
      %v826 = verf.f32.pop %v778
      %v827 = verf.f32.pop %v779
      %v828 = verf.f32.pop %v780
      %v829 = verf.f32.pop %v781
      %v830 = verf.f32.pop %v782
      %v831 = verf.f32.pop %v783
      %v832 = verf.f32.pop %v784
      %v833 = verf.f32.pop %v785
      %v834 = verf.f32.pop %v786
      %v835 = verf.f32.pop %v787
      %v836 = verf.f32.pop %v788
      %v837 = verf.f32.pop %v789
      %v838 = verf.f32.pop %v790
      %v839 = verf.f32.pop %v791
      %v840 = verf.f32.pop %v792
      %v841 = verf.f32.pop %v793
      %v842 = verf.f32.pop %v794
      %v843 = vadd.f32 %v795, 1.0
      %v844 = vadd.f32 %v796, 1.0
      %v845 = vadd.f32 %v797, 1.0
      %v846 = vadd.f32 %v798, 1.0
      %v847 = vadd.f32 %v799, 1.0
      %v848 = vadd.f32 %v800, 1.0
      %v849 = vadd.f32 %v801, 1.0
      %v850 = vadd.f32 %v802, 1.0
      %v851 = vadd.f32 %v803, 1.0
      %v852 = vadd.f32 %v804, 1.0
      %v853 = vadd.f32 %v805, 1.0
      %v854 = vadd.f32 %v806, 1.0
      %v855 = vadd.f32 %v807, 1.0
      %v856 = vadd.f32 %v808, 1.0
      %v857 = vadd.f32 %v809, 1.0
      %v858 = vadd.f32 %v810, 1.0
      %v859 = vadd.f32 %v811, 1.0
      %v860 = vadd.f32 %v812, 1.0
      %v861 = vadd.f32 %v813, 1.0
      %v862 = vadd.f32 %v814, 1.0
      %v863 = vadd.f32 %v815, 1.0
      %v864 = vadd.f32 %v816, 1.0
      %v865 = vadd.f32 %v817, 1.0
      %v866 = vadd.f32 %v818, 1.0
      %v867 = vadd.f32 %v819, 1.0
      %v868 = vadd.f32 %v820, 1.0
      %v869 = vadd.f32 %v821, 1.0
      %v870 = vadd.f32 %v822, 1.0
      %v871 = vadd.f32 %v823, 1.0
      %v872 = vadd.f32 %v824, 1.0
      %v873 = vadd.f32 %v825, 1.0
      %v874 = vadd.f32 %v826, 1.0
      %v875 = vadd.f32 %v827, 1.0
      %v876 = vadd.f32 %v828, 1.0
      %v877 = vadd.f32 %v829, 1.0
      %v878 = vadd.f32 %v830, 1.0
      %v879 = vadd.f32 %v831, 1.0
      %v880 = vadd.f32 %v832, 1.0
      %v881 = vadd.f32 %v833, 1.0
      %v882 = vadd.f32 %v834, 1.0
      %v883 = vadd.f32 %v835, 1.0
      %v884 = vadd.f32 %v836, 1.0
      %v885 = vadd.f32 %v837, 1.0
      %v886 = vadd.f32 %v838, 1.0
      %v887 = vadd.f32 %v839, 1.0
      %v888 = vadd.f32 %v840, 1.0
      %v889 = vadd.f32 %v841, 1.0
      %v890 = vadd.f32 %v842, 1.0
      %v891 = vmul.f32 %v699, %v843
      %v892 = vmul.f32 %v700, %v844
      %v893 = vmul.f32 %v701, %v845
      %v894 = vmul.f32 %v702, %v846
      %v895 = vmul.f32 %v703, %v847
      %v896 = vmul.f32 %v704, %v848
      %v897 = vmul.f32 %v705, %v849
      %v898 = vmul.f32 %v706, %v850
      %v899 = vmul.f32 %v707, %v851
      %v900 = vmul.f32 %v708, %v852
      %v901 = vmul.f32 %v709, %v853
      %v902 = vmul.f32 %v710, %v854
      %v903 = vmul.f32 %v711, %v855
      %v904 = vmul.f32 %v712, %v856
      %v905 = vmul.f32 %v713, %v857
      %v906 = vmul.f32 %v714, %v858
      %v907 = vmul.f32 %v715, %v859
      %v908 = vmul.f32 %v716, %v860
      %v909 = vmul.f32 %v717, %v861
      %v910 = vmul.f32 %v718, %v862
      %v911 = vmul.f32 %v719, %v863
      %v912 = vmul.f32 %v720, %v864
      %v913 = vmul.f32 %v721, %v865
      %v914 = vmul.f32 %v722, %v866
      %v915 = vmul.f32 %v723, %v867
      %v916 = vmul.f32 %v724, %v868
      %v917 = vmul.f32 %v725, %v869
      %v918 = vmul.f32 %v726, %v870
      %v919 = vmul.f32 %v727, %v871
      %v920 = vmul.f32 %v728, %v872
      %v921 = vmul.f32 %v729, %v873
      %v922 = vmul.f32 %v730, %v874
      %v923 = vmul.f32 %v731, %v875
      %v924 = vmul.f32 %v732, %v876
      %v925 = vmul.f32 %v733, %v877
      %v926 = vmul.f32 %v734, %v878
      %v927 = vmul.f32 %v735, %v879
      %v928 = vmul.f32 %v736, %v880
      %v929 = vmul.f32 %v737, %v881
      %v930 = vmul.f32 %v738, %v882
      %v931 = vmul.f32 %v739, %v883
      %v932 = vmul.f32 %v740, %v884
      %v933 = vmul.f32 %v741, %v885
      %v934 = vmul.f32 %v742, %v886
      %v935 = vmul.f32 %v743, %v887
      %v936 = vmul.f32 %v744, %v888
      %v937 = vmul.f32 %v745, %v889
      %v938 = vmul.f32 %v746, %v890
      %v939 = vpack.c.bf16 %v893, %v891
      %v940 = vpack.c.bf16 %v894, %v892
      %v941 = vpack.c.bf16 %v897, %v895
      %v942 = vpack.c.bf16 %v898, %v896
      %v943 = vpack.c.bf16 %v901, %v899
      %v944 = vpack.c.bf16 %v902, %v900
      %v945 = vpack.c.bf16 %v905, %v903
      %v946 = vpack.c.bf16 %v906, %v904
      %v947 = vpack.c.bf16 %v909, %v907
      %v948 = vpack.c.bf16 %v910, %v908
      %v949 = vpack.c.bf16 %v913, %v911
      %v950 = vpack.c.bf16 %v914, %v912
      %v951 = vpack.c.bf16 %v917, %v915
      %v952 = vpack.c.bf16 %v918, %v916
      %v953 = vpack.c.bf16 %v921, %v919
      %v954 = vpack.c.bf16 %v922, %v920
      %v955 = vpack.c.bf16 %v925, %v923
      %v956 = vpack.c.bf16 %v926, %v924
      %v957 = vpack.c.bf16 %v929, %v927
      %v958 = vpack.c.bf16 %v930, %v928
      %v959 = vpack.c.bf16 %v933, %v931
      %v960 = vpack.c.bf16 %v934, %v932
      %v961 = vpack.c.bf16 %v937, %v935
      %v962 = vpack.c.bf16 %v938, %v936
      %v967 = vunpack.c.l.b16 %v325
      %v968 = vunpack.c.h.b16 %v325
      %v969 = vunpack.c.l.b16 %v326
      %v970 = vunpack.c.h.b16 %v326
      %v971 = vunpack.c.l.b16 %v327
      %v972 = vunpack.c.h.b16 %v327
      %v973 = vunpack.c.l.b16 %v328
      %v974 = vunpack.c.h.b16 %v328
      %v975 = vpack.c.b16 %v969, %v967
      %v976 = vpack.c.b16 %v970, %v968
      %v977 = vpack.c.b16 %v973, %v971
      %v978 = vpack.c.b16 %v974, %v972
      %vm981 = vcmask 523264
      %v983 = vsel %vm981, %v976, 0
      %v986 = vsel %vm981, %v978, 0
      %988 = vmatprep.subr.bf16.mxu0 %v954
      %989 = vmatpush1.bf16.msra.mxu0 %v953
      %990 = vmatprep.subr.bf16.mxu0 %v952
      %991 = vmatpush1.bf16.msra.mxu0 %v951
      %992 = vmatprep.subr.bf16.mxu0 %v950
      %993 = vmatpush1.bf16.msra.mxu0 %v949
      %994 = vmatprep.subr.bf16.mxu0 %v948
      %995 = vmatpush1.bf16.msra.mxu0 %v947
      %996 = vmatprep.subr.bf16.mxu0 %v946
      %997 = vmatpush1.bf16.msra.mxu0 %v945
      %998 = vmatprep.subr.bf16.mxu0 %v944
      %999 = vmatpush1.bf16.msra.mxu0 %v943
      %1000 = vmatprep.subr.bf16.mxu0 %v942
      %1001 = vmatpush1.bf16.msra.mxu0 %v941
      %1002 = vmatprep.subr.bf16.mxu0 %v940
      %1003 = vmatpush1.bf16.msra.mxu0 %v939
      %1004 = vmatprep.subr.bf16.mxu0 0
      %1005 = vmatpush2.bf16.msra.mxu0 0
      %1006 = vmatprep.subr.bf16.mxu0 0
      %1007 = vmatpush2.bf16.msra.mxu0 0
      %1008 = vmatprep.subr.bf16.mxu0 0
      %1009 = vmatpush2.bf16.msra.mxu0 0
      %1010 = vmatprep.subr.bf16.mxu0 0
      %1011 = vmatpush2.bf16.msra.mxu0 0
      %1012 = vmatprep.subr.bf16.mxu0 %v962
      %1013 = vmatpush2.bf16.msra.mxu0 %v961
      %1014 = vmatprep.subr.bf16.mxu0 %v960
      %1015 = vmatpush2.bf16.msra.mxu0 %v959
      %1016 = vmatprep.subr.bf16.mxu0 %v958
      %1017 = vmatpush2.bf16.msra.mxu0 %v957
      %1018 = vmatprep.subr.bf16.mxu0 %v956
      %1019 = vmatpush2.bf16.msra.mxu0 %v955
      %1020 = vmatprep.mubr.bf16.mxu0 %v983
      %1021 = vmatmul.mubr.bf16.gmra.mxu0 %v975
      %v1022 = vpop.f32.mrf.mxu0
      %v1023 = vadd.f32 0.0, %v1022
      %v1024 = vpop.f32.mrf.mxu0
      %v1025 = vadd.f32 0.0, %v1024
      %v1026 = vpop.f32.mrf.mxu0
      %v1027 = vadd.f32 0.0, %v1026
      %v1028 = vpop.f32.mrf.mxu0
      %v1029 = vadd.f32 0.0, %v1028
      %1030 = vmatprep.mubr.bf16.mxu0 %v986
      %1031 = vmatmul.mubr.bf16.gmra.mxu0 %v977
      %v1032 = vpop.f32.mrf.mxu0
      %v1033 = vadd.f32 0.0, %v1032
      %v1034 = vpop.f32.mrf.mxu0
      %v1035 = vadd.f32 0.0, %v1034
      %v1036 = vpop.f32.mrf.mxu0
      %v1037 = vadd.f32 0.0, %v1036
      %v1038 = vpop.f32.mrf.mxu0
      %v1039 = vadd.f32 0.0, %v1038
      %1040 = vdwg.mxu0
      %v1041 = vadd.f32 %v265, %v1023
      %v1042 = vadd.f32 %v266, %v1025
      %v1043 = vadd.f32 %v267, %v1027
      %v1044 = vadd.f32 %v268, %v1029
      %v1045 = vadd.f32 %v269, %v1033
      %v1046 = vadd.f32 %v270, %v1035
      %v1047 = vadd.f32 %v271, %v1037
      %v1048 = vadd.f32 %v272, %v1039
      %v1049 = vld [vmem:[%s4] sm:$0xff]
      %v1050 = vld [vmem:[%s4 + $0x8] sm:$0xff]
      %v1051 = vld [vmem:[%s4 + $0x10] sm:$0xff]
      %v1052 = vld [vmem:[%s4 + $0x18] sm:$0xff]
      %1054 = vset.pattern.permute.xlu0 0
      %1055 = vperm.xlu0 %1054, %v1049
      %v1056 = vpop.permute.xlu0 %1055
      %1059 = vset.pattern.permute.xlu0 0
      %1060 = vperm.xlu0 %1059, %v1050
      %v1061 = vpop.permute.xlu0 %1060
      %1064 = vset.pattern.permute.xlu0 0
      %1065 = vperm.xlu0 %1064, %v1051
      %v1066 = vpop.permute.xlu0 %1065
      %1069 = vset.pattern.permute.xlu0 0
      %1070 = vperm.xlu0 %1069, %v1052
      %v1071 = vpop.permute.xlu0 %1070
      %v1073 = vadd.f32 %v1041, %v1056
      %v1074 = vadd.f32 %v1042, %v1056
      %v1075 = vadd.f32 %v1043, %v1061
      %v1076 = vadd.f32 %v1044, %v1061
      %v1077 = vadd.f32 %v1045, %v1066
      %v1078 = vadd.f32 %v1046, %v1066
      %v1079 = vadd.f32 %v1047, %v1071
      %v1080 = vadd.f32 %v1048, %v1071
      %1081 = vst [vmem:[%s262] sm:$0xff] %v1073
      %1082 = vst [vmem:[%s262 + $0x8] sm:$0xff] %v1074
      %1083 = vst [vmem:[%s262 + $0x10] sm:$0xff] %v1075
      %1084 = vst [vmem:[%s262 + $0x18] sm:$0xff] %v1076
      %1085 = vst [vmem:[%s262 + $0x20] sm:$0xff] %v1077
      %1086 = vst [vmem:[%s262 + $0x28] sm:$0xff] %v1078
      %1087 = vst [vmem:[%s262 + $0x30] sm:$0xff] %v1079
      %1088 = vst [vmem:[%s262 + $0x38] sm:$0xff] %v1080
      %s1089 = smul.u32 2, %s21
      %p1090 = scmp.lt.s32.totalorder %s20, 1
      %s1091 = scalar_select %p1090, %s20, 1
      %p1092 = scmp.lt.s32.totalorder %s1089, 1
      %s1093 = scalar_select %p1092, %s1089, 1
      %s1094 = smul.addr %s1091, 8
      %s1095 = sadd.s32 %s1093, %s1094
      %s1096 = smul.addr %s1095, 8
      %s1097 = scalar_lea.vmem %s5, %s1096
      // Predicated region
      $region41: #{dilated_conv_forward.3} parent=39 // pred_check
        %p1098 = pneg %p160
      $region42: #{dilated_conv_forward.3} parent=39 // pred_check_branch
        %1100 = sbr.rel (%p1098) target = $region44
      $region43: #{dilated_conv_forward.3} parent=39 // pred_region
        %s1101 = smul.u32 2, %s21
      $region44: #{dilated_conv_forward.3} parent=39 // pred_fallthru
        _
    $region40: #{dilated_conv_forward.3} parent=5 // pred_fallthru
      _
    %p1102 = scmp.le.s32.totalorder 2, %s11
    // Predicated region
    $region45: #{dilated_conv_forward.3} parent=5 // pred_check
      %p1103 = pneg %p1102
    $region46: #{dilated_conv_forward.3} parent=5 // pred_check_branch
      %1105 = sbr.rel (%p1103) target = $region48
    $region47: #{dilated_conv_forward.3} parent=5 // pred_region
      %s1106 = ssub.s32 %s11, 2
      // Predicated region
      $region49: #{dilated_conv_forward.3} parent=47 // pred_check
        %p1107 = pneg %p166
      $region50: #{dilated_conv_forward.3} parent=47 // pred_check_branch
        %1109 = sbr.rel (%p1107) target = $region52
      $region51: #{dilated_conv_forward.3} parent=47 // pred_region
        %s1110 = smul.u32 2, %s23
        %p1111 = scmp.lt.s32.totalorder %s22, 1
        %s1112 = scalar_select %p1111, %s22, 1
        %p1113 = scmp.lt.s32.totalorder %s1110, 1
        %s1114 = scalar_select %p1113, %s1110, 1
        %s1115 = smul.addr %s1112, 8
        %s1116 = sadd.s32 %s1114, %s1115
        %s1117 = smul.addr %s1116, 8
        %s1118 = scalar_lea.vmem %s5, %s1117
      $region52: #{dilated_conv_forward.3} parent=47 // pred_fallthru
        _
    $region48: #{dilated_conv_forward.3} parent=5 // pred_fallthru
      _
  $region6: #{dilated_conv_forward.3} parent=0 // loop_footer
    %s15 = sadd.s32 1, %s11
  $region7: #{dilated_conv_forward.3} parent=0 // loop_footer_branch
    %10 = sbr.rel target = $region3
  $region8: #{dilated_conv_forward.3} parent=0 // loop_exit
    _

</llo_original>
